<compile_context>
chip_gen: v7x
topology: tpu7x:2x2x1
jax: 0.10.0
libtpu: 0.0.40
codegen_flags: <defaults>
</compile_context>

<pallas_src>
from functools import partial

import jax
import jax.numpy as jnp
from jax import lax
from jax.experimental import pallas as pl
from jax.experimental.pallas import tpu as pltpu


def _round_up(x, m):
    return (x + m - 1) // m * m


def _gru_head_kernel(x_ref, h0_ref, whh_ref, wih_ref, bi_ref, bhn_ref,
                     wl_ref, bl_ref, out_ref, hn_ref, *, gate_dtype):
    """One batch block of: single-layer GRU + Linear(H,1) + Sigmoid.

    Per-block shapes (Hp = padded hidden, Bb = batch block on lanes, T = seq len):
      x_ref   (T, Bb)     f32   inputs (time on sublanes, batch on lanes)
      h0_ref  (Hp, Bb)    f32   initial hidden state (hidden on sublanes)
      whh_ref (3Hp, Hp)   bf16/f32  recurrent weights, gate blocks [r;z;n]
      wih_ref (3Hp, 1)    f32   input->gate weights (input_size = 1)
      bi_ref  (3Hp, 1)    f32   b_ih with b_hh folded in for the r,z gates
      bhn_ref (Hp, 1)     f32   recurrent bias of the n gate (r * (gh_n + b_hn))
      wl_ref  (Hp, 1)     f32   linear head weights
      bl_ref  (1, 1)      f32   linear head bias
      out_ref (T, Bb)     f32   sigmoid(linear(h_t)) per timestep (lane-dense)
      hn_ref  (Hp, Bb)    f32   final hidden state
    """
    Hp, Bb = h0_ref.shape
    T = x_ref.shape[0]
    mm_dtype = whh_ref.dtype
    f32 = jnp.float32

    def step(t, h):
        xt = x_ref[pl.ds(t, 1), :]                       # (1, Bb) — sublane row slice
        h_mm = h.astype(mm_dtype)                        # carried state stays f32

        # --- r gate: (Hp,Hp)x(Hp,Bb) MXU matmul, consumed immediately ---
        gh_r = jnp.dot(whh_ref[0:Hp, :], h_mm, preferred_element_type=f32)
        pre_r = gh_r + wih_ref[0:Hp, :] * xt + bi_ref[0:Hp, :]
        r = jax.nn.sigmoid(pre_r.astype(gate_dtype)).astype(f32)

        # --- z gate ---
        gh_z = jnp.dot(whh_ref[Hp:2 * Hp, :], h_mm, preferred_element_type=f32)
        pre_z = gh_z + wih_ref[Hp:2 * Hp, :] * xt + bi_ref[Hp:2 * Hp, :]
        z = jax.nn.sigmoid(pre_z.astype(gate_dtype)).astype(f32)

        # --- n gate (PyTorch: tanh(W_in x + b_in + r*(W_hn h + b_hn))) ---
        gh_n = jnp.dot(whh_ref[2 * Hp:3 * Hp, :], h_mm, preferred_element_type=f32)
        pre_n = r * (gh_n + bhn_ref[...]) + wih_ref[2 * Hp:3 * Hp, :] * xt + bi_ref[2 * Hp:3 * Hp, :]
        n = jnp.tanh(pre_n.astype(gate_dtype)).astype(f32)

        h_new = (1.0 - z) * n + z * h                    # update carried in f32

        # --- fused Linear(H,1) + Sigmoid head: VPU mul + sublane reduce (XLU) ---
        y = jax.nn.sigmoid(jnp.sum(h_new * wl_ref[...], axis=0, keepdims=True)
                           + bl_ref[...])                # (1, Bb)
        out_ref[pl.ds(t, 1), :] = y                      # lane-dense row store
        return h_new

    h_last = lax.fori_loop(0, T, step, h0_ref[...], unroll=1)
    hn_ref[...] = h_last


def rnn_forward(x, hidden, params, *, recur_dtype=jnp.bfloat16,
                gate_dtype=jnp.float32, batch_block=128):
    """x: (B, T, 1) f32; hidden: (1, B, H) or None. Returns (output (B,T,1), hidden (1,B,H)).

    recur_dtype: dtype of the recurrent matmul operands (bf16 fast / f32 exact).
    gate_dtype:  dtype of the sigmoid/tanh nonlinearities (use bf16 on v6e/v7x
                 for EUP throughput, keep f32 on v5e).
    """
    B, T, _ = x.shape
    H = params["weight_hh"].shape[1]
    f32 = jnp.float32

    Hp = _round_up(H, 128)                               # tile-aligned gate blocks

    # Batch block on lanes; prefer >= 2 blocks so v7x's two TensorCores both work.
    Bp8 = _round_up(B, 8)
    Bb = min(_round_up(batch_block, 8), Bp8)
    if Bp8 // Bb < 2 and Bp8 >= 16:
        Bb = _round_up((Bp8 + 1) // 2, 8)
    Bp = _round_up(B, Bb)
    nB = Bp // Bb

    h0 = jnp.zeros((B, H), f32) if hidden is None else hidden[0].astype(f32)

    # ---- one-time parameter packing (wrapper glue, not the hot path) ----
    def pad_gate_col(v):                                 # (3H,) -> (3Hp, 1)
        return jnp.zeros((3, Hp), f32).at[:, :H].set(v.reshape(3, H)).reshape(3 * Hp, 1)

    whh = params["weight_hh"].astype(f32)                # (3H, H), torch orientation
    whh_p = (jnp.zeros((3, Hp, Hp), f32)
             .at[:, :H, :H].set(whh.reshape(3, H, H))
             .reshape(3 * Hp, Hp).astype(recur_dtype))   # (3Hp, Hp)

    wih_c = pad_gate_col(params["weight_ih"].astype(f32)[:, 0])          # (3Hp, 1)
    bih = params["bias_ih"].astype(f32)
    bhh = params["bias_hh"].astype(f32)
    bi_c = pad_gate_col(jnp.concatenate([bih[:2 * H] + bhh[:2 * H],     # fold r,z biases
                                         bih[2 * H:]]))                 # (3Hp, 1)
    bhn_c = jnp.zeros((Hp, 1), f32).at[:H, 0].set(bhh[2 * H:])           # (Hp, 1)
    wl_c = jnp.zeros((Hp, 1), f32).at[:H, 0].set(params["lin_w"].astype(f32)[0])
    bl = params["lin_b"].astype(f32).reshape(1, 1)                       # (1, 1)

    # ---- input / state packing: batch padded and mapped to lanes ----
    x2 = jnp.zeros((Bp, T), f32).at[:B].set(x[..., 0].astype(f32))       # (Bp, T)
    xk = x2.reshape(nB, Bb, T).transpose(0, 2, 1)                        # (nB, T, Bb)
    h0k = (jnp.zeros((Bp, Hp), f32).at[:B, :H].set(h0)
           .reshape(nB, Bb, Hp).transpose(0, 2, 1))                      # (nB, Hp, Bb)

    # ---- explicit VMEM budget from the true tiled footprint (double-buffered) ----
    bpe = jnp.dtype(recur_dtype).itemsize
    blk_io = 4 * (T * Bb + Hp * Bb)                      # x + h0  (== out + hn)
    w_bytes = bpe * 3 * Hp * Hp + 4 * (2 * 3 * Hp + 2 * Hp + 1)
    vmem_need = 2 * (2 * blk_io + w_bytes)               # 2x for double buffering
    vmem_limit = int(min(64 * 2 ** 20, max(2 * vmem_need, 8 * 2 ** 20)))

    per_blk = lambda i: (i, 0, 0)
    shared2 = lambda i: (0, 0)

    outk, hnk = pl.pallas_call(
        partial(_gru_head_kernel, gate_dtype=gate_dtype),
        grid=(nB,),
        in_specs=[
            pl.BlockSpec((None, T, Bb), per_blk),        # x
            pl.BlockSpec((None, Hp, Bb), per_blk),       # h0
            pl.BlockSpec((3 * Hp, Hp), shared2),         # W_hh
            pl.BlockSpec((3 * Hp, 1), shared2),          # W_ih column
            pl.BlockSpec((3 * Hp, 1), shared2),          # folded biases column
            pl.BlockSpec((Hp, 1), shared2),              # b_hn column
            pl.BlockSpec((Hp, 1), shared2),              # linear W column
            pl.BlockSpec((1, 1), shared2),               # linear b
        ],
        out_specs=(
            pl.BlockSpec((None, T, Bb), per_blk),        # out
            pl.BlockSpec((None, Hp, Bb), per_blk),       # h_n
        ),
        out_shape=(
            jax.ShapeDtypeStruct((nB, T, Bb), f32),
            jax.ShapeDtypeStruct((nB, Hp, Bb), f32),
        ),
        compiler_params=pltpu.CompilerParams(
            dimension_semantics=("parallel",),           # batch blocks across TCs (v7x)
            vmem_limit_bytes=vmem_limit,
        ),
    )(xk, h0k, whh_p, wih_c, bi_c, bhn_c, wl_c, bl)

    # restore PyTorch shapes (wrapper-side XLA glue)
    out = outk.transpose(0, 2, 1).reshape(Bp, T)[:B][..., None]          # (B, T, 1)
    hn = hnk.transpose(0, 2, 1).reshape(Bp, Hp)[:B, :H][None, ...]       # (1, B, H)
    return out, hn


def _init_params(key, hidden_size):
    """PyTorch-style init: U(-1/sqrt(H), 1/sqrt(H)) for all GRU / Linear params."""
    H = hidden_size
    k = 1.0 / jnp.sqrt(jnp.float32(H))
    keys = jax.random.split(key, 6)
    u = lambda kk, shape: jax.random.uniform(kk, shape, jnp.float32, -k, k)
    return {
        "weight_ih": u(keys[0], (3 * H, 1)),   # torch weight_ih_l0
        "weight_hh": u(keys[1], (3 * H, H)),   # torch weight_hh_l0
        "bias_ih":   u(keys[2], (3 * H,)),
        "bias_hh":   u(keys[3], (3 * H,)),
        "lin_w":     u(keys[4], (1, H)),       # torch Linear.weight
        "lin_b":     u(keys[5], (1,)),
    }


def _reference_forward(x, hidden, params):
    """Pure-JAX f32 reference of the same math (correctness spot check)."""
    B, T, _ = x.shape
    H = params["weight_hh"].shape[1]
    h = jnp.zeros((B, H), jnp.float32) if hidden is None else hidden[0]
    outs = []
    for t in range(T):
        xt = x[:, t, :]
        gi = xt @ params["weight_ih"].T + params["bias_ih"]
        gh = h @ params["weight_hh"].T + params["bias_hh"]
        r = jax.nn.sigmoid(gi[:, :H] + gh[:, :H])
        z = jax.nn.sigmoid(gi[:, H:2 * H] + gh[:, H:2 * H])
        n = jnp.tanh(gi[:, 2 * H:] + r * gh[:, 2 * H:])
        h = (1 - z) * n + z * h
        outs.append(h)
    hs = jnp.stack(outs, axis=1)
    y = jax.nn.sigmoid(hs @ params["lin_w"].T + params["lin_b"])
    return y, h[None, ...]


if __name__ == "__main__":
    B, T, H = 2, 8, 32
    key = jax.random.PRNGKey(0)
    k_param, k_x = jax.random.split(key)

    params = _init_params(k_param, H)
    x = jax.random.uniform(k_x, (B, T, 1), jnp.float32)   # pixel sequence in [0, 1)

    ref_out, ref_hn = _reference_forward(x, None, params)

    # exact-semantics path (f32 recurrent matmul, f32 gates): tight tolerance
    out32, hn32 = rnn_forward(x, None, params, recur_dtype=jnp.float32)
    out32, hn32 = jax.block_until_ready((out32, hn32))
    assert out32.shape == (B, T, 1) and hn32.shape == (1, B, H)
    assert jnp.allclose(out32, ref_out, atol=1e-5, rtol=1e-5)
    assert jnp.allclose(hn32, ref_hn, atol=1e-5, rtol=1e-5)

    # fast path (bf16 recurrent matmul, f32 carried state): bf16-level tolerance
    # NOTE: bf16 error compounds with T; revalidate at production sequence length.
    out, hn = rnn_forward(x, None, params)
    out, hn = jax.block_until_ready((out, hn))
    assert out.shape == (B, T, 1) and hn.shape == (1, B, H)
    assert jnp.allclose(out, ref_out, atol=1e-2, rtol=1e-2)
    assert jnp.allclose(hn, ref_hn, atol=2e-2, rtol=2e-2)

    print("KERNEL_OK")
</pallas_src>

<mosaic_0001>
module attributes {stable_mosaic.version = 11 : i64} {
  func.func @_gru_head_kernel(%arg0: i32, %arg1: memref<1x8x8xf32, #tpu.memory_space<vmem>>, %arg2: memref<1x128x8xf32, #tpu.memory_space<vmem>>, %arg3: memref<384x128xf32, #tpu.memory_space<vmem>>, %arg4: memref<384x1xf32, #tpu.memory_space<vmem>>, %arg5: memref<384x1xf32, #tpu.memory_space<vmem>>, %arg6: memref<128x1xf32, #tpu.memory_space<vmem>>, %arg7: memref<128x1xf32, #tpu.memory_space<vmem>>, %arg8: memref<1x1xf32, #tpu.memory_space<vmem>>, %arg9: memref<1x8x8xf32, #tpu.memory_space<vmem>>, %arg10: memref<1x128x8xf32, #tpu.memory_space<vmem>>) attributes {dimension_semantics = [#tpu.dimension_semantics<parallel>], iteration_bounds = array<i64: 1>, scalar_prefetch = 0 : i64, scratch_operands = 0 : i64, tpu.core_type = #tpu.core_type<tc>, window_params = [{transform_indices = @transform_0, window_bounds = array<i64: 1, 8, 8>}, {transform_indices = @transform_1, window_bounds = array<i64: 1, 128, 8>}, {pipeline_mode = #tpu.pipeline_mode<synchronous>, transform_indices = @transform_2, window_bounds = array<i64: 384, 128>}, {pipeline_mode = #tpu.pipeline_mode<synchronous>, transform_indices = @transform_3, window_bounds = array<i64: 384, 1>}, {pipeline_mode = #tpu.pipeline_mode<synchronous>, transform_indices = @transform_4, window_bounds = array<i64: 384, 1>}, {pipeline_mode = #tpu.pipeline_mode<synchronous>, transform_indices = @transform_5, window_bounds = array<i64: 128, 1>}, {pipeline_mode = #tpu.pipeline_mode<synchronous>, transform_indices = @transform_6, window_bounds = array<i64: 128, 1>}, {pipeline_mode = #tpu.pipeline_mode<synchronous>, transform_indices = @transform_7, window_bounds = array<i64: 1, 1>}, {transform_indices = @transform_8, window_bounds = array<i64: 1, 8, 8>}, {transform_indices = @transform_9, window_bounds = array<i64: 1, 128, 8>}]} {
    %c0 = arith.constant 0 : index
    %c0_0 = arith.constant 0 : index
    %c0_1 = arith.constant 0 : index
    %0 = vector.load %arg2[%c0, %c0_0, %c0_1] : memref<1x128x8xf32, #tpu.memory_space<vmem>>, vector<1x128x8xf32>
    %1 = vector.shape_cast %0 : vector<1x128x8xf32> to vector<128x8xf32>
    %c0_i32 = arith.constant 0 : i32
    %c8_i32 = arith.constant 8 : i32
    %2 = arith.addi %c0_i32, %c8_i32 : i32
    %c1_i32 = arith.constant 1 : i32
    %3 = scf.for %arg11 = %c0_i32 to %2 step %c1_i32 iter_args(%arg12 = %1) -> (vector<128x8xf32>)  : i32 {
      %c0_6 = arith.constant 0 : index
      %7 = arith.index_cast %arg11 : i32 to index
      %c0_7 = arith.constant 0 : index
      %8 = vector.load %arg1[%c0_6, %7, %c0_7] : memref<1x8x8xf32, #tpu.memory_space<vmem>>, vector<1x1x8xf32>
      %9 = vector.shape_cast %8 : vector<1x1x8xf32> to vector<1x8xf32>
      %c0_8 = arith.constant 0 : index
      %c0_9 = arith.constant 0 : index
      %10 = vector.load %arg3[%c0_8, %c0_9] : memref<384x128xf32, #tpu.memory_space<vmem>>, vector<128x128xf32>
      %cst = arith.constant dense<0.000000e+00> : vector<128x8xf32>
      %11 = tpu.matmul %10, %arg12, %cst {dimension_numbers = #tpu.dot_dimension_numbers<[1], [0], [0], [1], [0, 0, 1, 1], [], []>} : vector<128x128xf32>, vector<128x8xf32>, vector<128x8xf32> -> vector<128x8xf32>
      %c0_10 = arith.constant 0 : index
      %c0_11 = arith.constant 0 : index
      %12 = vector.load %arg4[%c0_10, %c0_11] : memref<384x1xf32, #tpu.memory_space<vmem>>, vector<128x1xf32>
      %13 = vector.broadcast %12 : vector<128x1xf32> to vector<128x8xf32>
      %14 = vector.broadcast %9 : vector<1x8xf32> to vector<128x8xf32>
      %15 = arith.mulf %13, %14 : vector<128x8xf32>
      %16 = arith.addf %11, %15 : vector<128x8xf32>
      %c0_12 = arith.constant 0 : index
      %c0_13 = arith.constant 0 : index
      %17 = vector.load %arg5[%c0_12, %c0_13] : memref<384x1xf32, #tpu.memory_space<vmem>>, vector<128x1xf32>
      %18 = vector.broadcast %17 : vector<128x1xf32> to vector<128x8xf32>
      %19 = arith.addf %16, %18 : vector<128x8xf32>
      %20 = arith.negf %19 : vector<128x8xf32>
      %21 = math.exp %20 : vector<128x8xf32>
      %cst_14 = arith.constant 1.000000e+00 : f32
      %22 = vector.broadcast %cst_14 : f32 to vector<128x8xf32>
      %23 = arith.addf %22, %21 : vector<128x8xf32>
      %24 = arith.divf %22, %23 : vector<128x8xf32>
      %c128 = arith.constant 128 : index
      %c0_15 = arith.constant 0 : index
      %25 = vector.load %arg3[%c128, %c0_15] : memref<384x128xf32, #tpu.memory_space<vmem>>, vector<128x128xf32>
      %cst_16 = arith.constant dense<0.000000e+00> : vector<128x8xf32>
      %26 = tpu.matmul %25, %arg12, %cst_16 {dimension_numbers = #tpu.dot_dimension_numbers<[1], [0], [0], [1], [0, 0, 1, 1], [], []>} : vector<128x128xf32>, vector<128x8xf32>, vector<128x8xf32> -> vector<128x8xf32>
      %c128_17 = arith.constant 128 : index
      %c0_18 = arith.constant 0 : index
      %27 = vector.load %arg4[%c128_17, %c0_18] : memref<384x1xf32, #tpu.memory_space<vmem>>, vector<128x1xf32>
      %28 = vector.broadcast %27 : vector<128x1xf32> to vector<128x8xf32>
      %29 = vector.broadcast %9 : vector<1x8xf32> to vector<128x8xf32>
      %30 = arith.mulf %28, %29 : vector<128x8xf32>
      %31 = arith.addf %26, %30 : vector<128x8xf32>
      %c128_19 = arith.constant 128 : index
      %c0_20 = arith.constant 0 : index
      %32 = vector.load %arg5[%c128_19, %c0_20] : memref<384x1xf32, #tpu.memory_space<vmem>>, vector<128x1xf32>
      %33 = vector.broadcast %32 : vector<128x1xf32> to vector<128x8xf32>
      %34 = arith.addf %31, %33 : vector<128x8xf32>
      %35 = arith.negf %34 : vector<128x8xf32>
      %36 = math.exp %35 : vector<128x8xf32>
      %cst_21 = arith.constant 1.000000e+00 : f32
      %37 = vector.broadcast %cst_21 : f32 to vector<128x8xf32>
      %38 = arith.addf %37, %36 : vector<128x8xf32>
      %39 = arith.divf %37, %38 : vector<128x8xf32>
      %c256 = arith.constant 256 : index
      %c0_22 = arith.constant 0 : index
      %40 = vector.load %arg3[%c256, %c0_22] : memref<384x128xf32, #tpu.memory_space<vmem>>, vector<128x128xf32>
      %cst_23 = arith.constant dense<0.000000e+00> : vector<128x8xf32>
      %41 = tpu.matmul %40, %arg12, %cst_23 {dimension_numbers = #tpu.dot_dimension_numbers<[1], [0], [0], [1], [0, 0, 1, 1], [], []>} : vector<128x128xf32>, vector<128x8xf32>, vector<128x8xf32> -> vector<128x8xf32>
      %c0_24 = arith.constant 0 : index
      %c0_25 = arith.constant 0 : index
      %42 = vector.load %arg6[%c0_24, %c0_25] : memref<128x1xf32, #tpu.memory_space<vmem>>, vector<128x1xf32>
      %43 = vector.broadcast %42 : vector<128x1xf32> to vector<128x8xf32>
      %44 = arith.addf %41, %43 : vector<128x8xf32>
      %45 = arith.mulf %24, %44 : vector<128x8xf32>
      %c256_26 = arith.constant 256 : index
      %c0_27 = arith.constant 0 : index
      %46 = vector.load %arg4[%c256_26, %c0_27] : memref<384x1xf32, #tpu.memory_space<vmem>>, vector<128x1xf32>
      %47 = vector.broadcast %46 : vector<128x1xf32> to vector<128x8xf32>
      %48 = vector.broadcast %9 : vector<1x8xf32> to vector<128x8xf32>
      %49 = arith.mulf %47, %48 : vector<128x8xf32>
      %50 = arith.addf %45, %49 : vector<128x8xf32>
      %c256_28 = arith.constant 256 : index
      %c0_29 = arith.constant 0 : index
      %51 = vector.load %arg5[%c256_28, %c0_29] : memref<384x1xf32, #tpu.memory_space<vmem>>, vector<128x1xf32>
      %52 = vector.broadcast %51 : vector<128x1xf32> to vector<128x8xf32>
      %53 = arith.addf %50, %52 : vector<128x8xf32>
      %54 = math.tanh %53 : vector<128x8xf32>
      %cst_30 = arith.constant 1.000000e+00 : f32
      %55 = vector.broadcast %cst_30 : f32 to vector<128x8xf32>
      %56 = arith.subf %55, %39 : vector<128x8xf32>
      %57 = arith.mulf %56, %54 : vector<128x8xf32>
      %58 = arith.mulf %39, %arg12 : vector<128x8xf32>
      %59 = arith.addf %57, %58 : vector<128x8xf32>
      %c0_31 = arith.constant 0 : index
      %c0_32 = arith.constant 0 : index
      %60 = vector.load %arg7[%c0_31, %c0_32] : memref<128x1xf32, #tpu.memory_space<vmem>>, vector<128x1xf32>
      %61 = vector.broadcast %60 : vector<128x1xf32> to vector<128x8xf32>
      %62 = arith.mulf %59, %61 : vector<128x8xf32>
      %cst_33 = arith.constant dense<0.000000e+00> : vector<8xf32>
      %63 = vector.multi_reduction <add>, %62, %cst_33 [0] : vector<128x8xf32> to vector<8xf32>
      %64 = vector.shape_cast %63 : vector<8xf32> to vector<1x8xf32>
      %c0_34 = arith.constant 0 : index
      %c0_35 = arith.constant 0 : index
      %65 = vector.load %arg8[%c0_34, %c0_35] : memref<1x1xf32, #tpu.memory_space<vmem>>, vector<1x1xf32>
      %66 = vector.broadcast %65 : vector<1x1xf32> to vector<1x8xf32>
      %67 = arith.addf %64, %66 : vector<1x8xf32>
      %68 = arith.negf %67 : vector<1x8xf32>
      %69 = math.exp %68 : vector<1x8xf32>
      %cst_36 = arith.constant 1.000000e+00 : f32
      %70 = vector.broadcast %cst_36 : f32 to vector<1x8xf32>
      %71 = arith.addf %70, %69 : vector<1x8xf32>
      %72 = arith.divf %70, %71 : vector<1x8xf32>
      %c0_37 = arith.constant 0 : index
      %73 = arith.index_cast %arg11 : i32 to index
      %c0_38 = arith.constant 0 : index
      %74 = vector.load %arg9[%c0_37, %73, %c0_38] : memref<1x8x8xf32, #tpu.memory_space<vmem>>, vector<1x1x8xf32>
      %75 = vector.shape_cast %74 : vector<1x1x8xf32> to vector<1x8xf32>
      %76 = vector.shape_cast %72 : vector<1x8xf32> to vector<1x1x8xf32>
      tpu.vector_store %arg9[%c0_37, %73, %c0_38], %76 {strides = array<i32>} : memref<1x8x8xf32, #tpu.memory_space<vmem>>, vector<1x1x8xf32>,
      scf.yield %59 : vector<128x8xf32>
    }
    %c8_i32_2 = arith.constant 8 : i32
    %c0_3 = arith.constant 0 : index
    %c0_4 = arith.constant 0 : index
    %c0_5 = arith.constant 0 : index
    %4 = vector.load %arg10[%c0_3, %c0_4, %c0_5] : memref<1x128x8xf32, #tpu.memory_space<vmem>>, vector<1x128x8xf32>
    %5 = vector.shape_cast %4 : vector<1x128x8xf32> to vector<128x8xf32>
    %6 = vector.shape_cast %3 : vector<128x8xf32> to vector<1x128x8xf32>
    tpu.vector_store %arg10[%c0_3, %c0_4, %c0_5], %6 {strides = array<i32>} : memref<1x128x8xf32, #tpu.memory_space<vmem>>, vector<1x128x8xf32>,
    return
  }
  func.func @transform_0(%arg0: i32) -> (i32, i32, i32) {
    %c0_i32 = arith.constant 0 : i32
    %c0_i32_0 = arith.constant 0 : i32
    %c0_i32_1 = arith.constant 0 : i32
    return %arg0, %c0_i32, %c0_i32_0 : i32, i32, i32
  }
  func.func @transform_1(%arg0: i32) -> (i32, i32, i32) {
    %c0_i32 = arith.constant 0 : i32
    %c0_i32_0 = arith.constant 0 : i32
    %c0_i32_1 = arith.constant 0 : i32
    return %arg0, %c0_i32, %c0_i32_0 : i32, i32, i32
  }
  func.func @transform_2(%arg0: i32) -> (i32, i32) {
    %c0_i32 = arith.constant 0 : i32
    %c0_i32_0 = arith.constant 0 : i32
    %c0_i32_1 = arith.constant 0 : i32
    return %c0_i32, %c0_i32_0 : i32, i32
  }
  func.func @transform_3(%arg0: i32) -> (i32, i32) {
    %c0_i32 = arith.constant 0 : i32
    %c0_i32_0 = arith.constant 0 : i32
    %c0_i32_1 = arith.constant 0 : i32
    return %c0_i32, %c0_i32_0 : i32, i32
  }
  func.func @transform_4(%arg0: i32) -> (i32, i32) {
    %c0_i32 = arith.constant 0 : i32
    %c0_i32_0 = arith.constant 0 : i32
    %c0_i32_1 = arith.constant 0 : i32
    return %c0_i32, %c0_i32_0 : i32, i32
  }
  func.func @transform_5(%arg0: i32) -> (i32, i32) {
    %c0_i32 = arith.constant 0 : i32
    %c0_i32_0 = arith.constant 0 : i32
    %c0_i32_1 = arith.constant 0 : i32
    return %c0_i32, %c0_i32_0 : i32, i32
  }
  func.func @transform_6(%arg0: i32) -> (i32, i32) {
    %c0_i32 = arith.constant 0 : i32
    %c0_i32_0 = arith.constant 0 : i32
    %c0_i32_1 = arith.constant 0 : i32
    return %c0_i32, %c0_i32_0 : i32, i32
  }
  func.func @transform_7(%arg0: i32) -> (i32, i32) {
    %c0_i32 = arith.constant 0 : i32
    %c0_i32_0 = arith.constant 0 : i32
    %c0_i32_1 = arith.constant 0 : i32
    return %c0_i32, %c0_i32_0 : i32, i32
  }
  func.func @transform_8(%arg0: i32) -> (i32, i32, i32) {
    %c0_i32 = arith.constant 0 : i32
    %c0_i32_0 = arith.constant 0 : i32
    %c0_i32_1 = arith.constant 0 : i32
    return %arg0, %c0_i32, %c0_i32_0 : i32, i32, i32
  }
  func.func @transform_9(%arg0: i32) -> (i32, i32, i32) {
    %c0_i32 = arith.constant 0 : i32
    %c0_i32_0 = arith.constant 0 : i32
    %c0_i32_1 = arith.constant 0 : i32
    return %arg0, %c0_i32, %c0_i32_0 : i32, i32, i32
  }
}

</mosaic_0001>

<llo_original>
// kernel: tpu_custom_call.1
$region0: #{tpu_custom_call.1}
  #allocation0 [shape = 'u32[]', space=smem, size = 0x4, offset = 0x4, fixed_abs, tag = 'smem constant byte address 0x4 - core index']
  #allocation1 [shape = 'u32[144,128]{1,0:T(1,128)}', space=vmem, size = 0x12000, scoped, tag = 'internal scratch']
  #allocation2 [shape = 'f32[1,1]{1,0:T(1,128)S(1)}', space=vmem, size = 0x200, scoped, tag = 'scoped memory for tpu_custom_call.1']
  %s0 = inlined_call_operand.vmem [shape: f32[1,8,8], index: 0, kind: input, shape index: {}]
  %s1 = inlined_call_operand.vmem [shape: f32[1,128,8], index: 1, kind: input, shape index: {}]
  %s2 = inlined_call_operand.vmem [shape: f32[384,128], index: 2, kind: input, shape index: {}]
  %s3 = inlined_call_operand.vmem [shape: f32[384,1], index: 3, kind: input, shape index: {}]
  %s4 = inlined_call_operand.vmem [shape: f32[384,1], index: 4, kind: input, shape index: {}]
  %s5 = inlined_call_operand.vmem [shape: f32[128,1], index: 5, kind: input, shape index: {}]
  %s6 = inlined_call_operand.vmem [shape: f32[128,1], index: 6, kind: input, shape index: {}]
  %s7 = inlined_call_operand.<no memory space> [shape: f32[1,1], index: 7, kind: input, shape index: {}]
  %s8 = inlined_call_operand.hbm [shape: f32[1,8,8], index: 8, kind: output, shape index: {0}]
  %s9 = inlined_call_operand.vmem [shape: f32[1,128,8], index: 9, kind: output, shape index: {1}]
  %10 = xla_tuple %s8, %s9
  %s11 = sld [smem:[#allocation0]]
  $region57: #{tpu_custom_call.1} parent=0
    _
  %s13 = ssub.s32 1, %s11
  %s14 = scalar_select 0, %s13, %s11
  %v15 = vstv %s7
  %16 = vst [vmem:[#allocation2] sm:$0x1] %v15
  $region1: #{tpu_custom_call.1} parent=0
    #allocation3 [shape = 'u8[4096]{0}', space=vmem, size = 0x1000, scoped, tag = 'output window, operand 0, single buffered']
    #allocation4 [shape = 's32[1]{0}', space=sflag, size = 0x4, scoped, tag = 'scoped memory for tpu_custom_call.1']
    %17 = vsyncpa [#allocation4], 0
    // Predicated region
    $region2: #{tpu_custom_call.1} parent=1 // pred_check
      _
    $region3: #{tpu_custom_call.1} parent=1 // pred_check_branch
      %19 = sbr.rel (0) target = $region5
    $region4: #{tpu_custom_call.1} parent=1 // pred_region
      _
    $region5: #{tpu_custom_call.1} parent=1 // pred_fallthru
      _
    // Predicated region
    $region6: #{tpu_custom_call.1} parent=1 // pred_check
      _
    $region7: #{tpu_custom_call.1} parent=1 // pred_check_branch
      %21 = sbr.rel (0) target = $region9
    $region8: #{tpu_custom_call.1} parent=1 // pred_region
      _
    $region9: #{tpu_custom_call.1} parent=1 // pred_fallthru
      _
    // Predicated region
    $region10: #{tpu_custom_call.1} parent=1 // pred_check
      _
    $region11: #{tpu_custom_call.1} parent=1 // pred_check_branch
      %23 = sbr.rel (0) target = $region13
    $region12: #{tpu_custom_call.1} parent=1 // pred_region
      _
    $region13: #{tpu_custom_call.1} parent=1 // pred_fallthru
      _
    // Predicated region
    $region14: #{tpu_custom_call.1} parent=1 // pred_check
      _
    $region15: #{tpu_custom_call.1} parent=1 // pred_check_branch
      %25 = sbr.rel (0) target = $region17
    $region16: #{tpu_custom_call.1} parent=1 // pred_region
      _
    $region17: #{tpu_custom_call.1} parent=1 // pred_fallthru
      _
    // Predicated region
    $region18: #{tpu_custom_call.1} parent=1 // pred_check
      _
    $region19: #{tpu_custom_call.1} parent=1 // pred_check_branch
      %27 = sbr.rel (0) target = $region21
    $region20: #{tpu_custom_call.1} parent=1 // pred_region
      _
    $region21: #{tpu_custom_call.1} parent=1 // pred_fallthru
      _
    // Predicated region
    $region22: #{tpu_custom_call.1} parent=1 // pred_check
      _
    $region23: #{tpu_custom_call.1} parent=1 // pred_check_branch
      %29 = sbr.rel (0) target = $region25
    $region24: #{tpu_custom_call.1} parent=1 // pred_region
      _
    $region25: #{tpu_custom_call.1} parent=1 // pred_fallthru
      _
    // Predicated region
    $region26: #{tpu_custom_call.1} parent=1 // pred_check
      _
    $region27: #{tpu_custom_call.1} parent=1 // pred_check_branch
      %31 = sbr.rel (0) target = $region29
    $region28: #{tpu_custom_call.1} parent=1 // pred_region
      _
    $region29: #{tpu_custom_call.1} parent=1 // pred_fallthru
      _
    // Predicated region
    $region30: #{tpu_custom_call.1} parent=1 // pred_check
      _
    $region31: #{tpu_custom_call.1} parent=1 // pred_check_branch
      %33 = sbr.rel (0) target = $region33
    $region32: #{tpu_custom_call.1} parent=1 // pred_region
      _
    $region33: #{tpu_custom_call.1} parent=1 // pred_fallthru
      _
    %v34 = vld [vmem:[%s1] sm:$0xff]
    %v35 = vld [vmem:[%s1 + $0x8] sm:$0xff]
    %v36 = vld [vmem:[%s1 + $0x10] sm:$0xff]
    %v37 = vld [vmem:[%s1 + $0x18] sm:$0xff]
    %v38 = vld [vmem:[%s1 + $0x20] sm:$0xff]
    %v39 = vld [vmem:[%s1 + $0x28] sm:$0xff]
    %v40 = vld [vmem:[%s1 + $0x30] sm:$0xff]
    %v41 = vld [vmem:[%s1 + $0x38] sm:$0xff]
    %v42 = vld [vmem:[%s1 + $0x40] sm:$0xff]
    %v43 = vld [vmem:[%s1 + $0x48] sm:$0xff]
    %v44 = vld [vmem:[%s1 + $0x50] sm:$0xff]
    %v45 = vld [vmem:[%s1 + $0x58] sm:$0xff]
    %v46 = vld [vmem:[%s1 + $0x60] sm:$0xff]
    %v47 = vld [vmem:[%s1 + $0x68] sm:$0xff]
    %v48 = vld [vmem:[%s1 + $0x70] sm:$0xff]
    %v49 = vld [vmem:[%s1 + $0x78] sm:$0xff]
    loop: start=0, step=1, limit=8
    $region34: #{tpu_custom_call.1} parent=1 // loop_pre_header
      _
    $region35: #{tpu_custom_call.1} parent=1 // loop_header
      %s51 = sphi 0, %s55
      %p52 = scmp.ge.s32.totalorder %s51, 8
      %v56 = vphi %v34, %v1617
      %v57 = vphi %v35, %v1618
      %v58 = vphi %v36, %v1619
      %v59 = vphi %v37, %v1620
      %v60 = vphi %v38, %v1621
      %v61 = vphi %v39, %v1622
      %v62 = vphi %v40, %v1623
      %v63 = vphi %v41, %v1624
      %v64 = vphi %v42, %v1625
      %v65 = vphi %v43, %v1626
      %v66 = vphi %v44, %v1627
      %v67 = vphi %v45, %v1628
      %v68 = vphi %v46, %v1629
      %v69 = vphi %v47, %v1630
      %v70 = vphi %v48, %v1631
      %v71 = vphi %v49, %v1632
    $region36: #{tpu_custom_call.1} parent=1 // loop_header_branch
      %54 = sbr.rel (%p52) target = $region40
    $region37: #{tpu_custom_call.1} parent=1 // loop_body
      %s72 = scalar_lea.vmem %s0, %s51
      %v73 = vld [vmem:[%s72] sm:$0x1]
      %v74 = vld [vmem:[%s2] sm:$0xff]
      %v75 = vld [vmem:[%s2 + $0x8] sm:$0xff]
      %v76 = vld [vmem:[%s2 + $0x10] sm:$0xff]
      %v77 = vld [vmem:[%s2 + $0x18] sm:$0xff]
      %v78 = vld [vmem:[%s2 + $0x20] sm:$0xff]
      %v79 = vld [vmem:[%s2 + $0x28] sm:$0xff]
      %v80 = vld [vmem:[%s2 + $0x30] sm:$0xff]
      %v81 = vld [vmem:[%s2 + $0x38] sm:$0xff]
      %v82 = vld [vmem:[%s2 + $0x40] sm:$0xff]
      %v83 = vld [vmem:[%s2 + $0x48] sm:$0xff]
      %v84 = vld [vmem:[%s2 + $0x50] sm:$0xff]
      %v85 = vld [vmem:[%s2 + $0x58] sm:$0xff]
      %v86 = vld [vmem:[%s2 + $0x60] sm:$0xff]
      %v87 = vld [vmem:[%s2 + $0x68] sm:$0xff]
      %v88 = vld [vmem:[%s2 + $0x70] sm:$0xff]
      %v89 = vld [vmem:[%s2 + $0x78] sm:$0xff]
      %v90 = vld [vmem:[%s3] sm:$0xff]
      %v91 = vld [vmem:[%s3 + $0x8] sm:$0xff]
      %v92 = vld [vmem:[%s3 + $0x10] sm:$0xff]
      %v93 = vld [vmem:[%s3 + $0x18] sm:$0xff]
      %v94 = vld [vmem:[%s3 + $0x20] sm:$0xff]
      %v95 = vld [vmem:[%s3 + $0x28] sm:$0xff]
      %v96 = vld [vmem:[%s3 + $0x30] sm:$0xff]
      %v97 = vld [vmem:[%s3 + $0x38] sm:$0xff]
      %v98 = vld [vmem:[%s3 + $0x40] sm:$0xff]
      %v99 = vld [vmem:[%s3 + $0x48] sm:$0xff]
      %v100 = vld [vmem:[%s3 + $0x50] sm:$0xff]
      %v101 = vld [vmem:[%s3 + $0x58] sm:$0xff]
      %v102 = vld [vmem:[%s3 + $0x60] sm:$0xff]
      %v103 = vld [vmem:[%s3 + $0x68] sm:$0xff]
      %v104 = vld [vmem:[%s3 + $0x70] sm:$0xff]
      %v105 = vld [vmem:[%s3 + $0x78] sm:$0xff]
      %107 = vset.pattern.permute.xlu0 0
      %108 = vperm.xlu0 %107, %v90
      %v109 = vpop.permute.xlu0 %108
      %112 = vset.pattern.permute.xlu0 0
      %113 = vperm.xlu0 %112, %v91
      %v114 = vpop.permute.xlu0 %113
      %117 = vset.pattern.permute.xlu0 0
      %118 = vperm.xlu0 %117, %v92
      %v119 = vpop.permute.xlu0 %118
      %122 = vset.pattern.permute.xlu0 0
      %123 = vperm.xlu0 %122, %v93
      %v124 = vpop.permute.xlu0 %123
      %127 = vset.pattern.permute.xlu0 0
      %128 = vperm.xlu0 %127, %v94
      %v129 = vpop.permute.xlu0 %128
      %132 = vset.pattern.permute.xlu0 0
      %133 = vperm.xlu0 %132, %v95
      %v134 = vpop.permute.xlu0 %133
      %137 = vset.pattern.permute.xlu0 0
      %138 = vperm.xlu0 %137, %v96
      %v139 = vpop.permute.xlu0 %138
      %142 = vset.pattern.permute.xlu0 0
      %143 = vperm.xlu0 %142, %v97
      %v144 = vpop.permute.xlu0 %143
      %147 = vset.pattern.permute.xlu0 0
      %148 = vperm.xlu0 %147, %v98
      %v149 = vpop.permute.xlu0 %148
      %152 = vset.pattern.permute.xlu0 0
      %153 = vperm.xlu0 %152, %v99
      %v154 = vpop.permute.xlu0 %153
      %157 = vset.pattern.permute.xlu0 0
      %158 = vperm.xlu0 %157, %v100
      %v159 = vpop.permute.xlu0 %158
      %162 = vset.pattern.permute.xlu0 0
      %163 = vperm.xlu0 %162, %v101
      %v164 = vpop.permute.xlu0 %163
      %167 = vset.pattern.permute.xlu0 0
      %168 = vperm.xlu0 %167, %v102
      %v169 = vpop.permute.xlu0 %168
      %172 = vset.pattern.permute.xlu0 0
      %173 = vperm.xlu0 %172, %v103
      %v174 = vpop.permute.xlu0 %173
      %177 = vset.pattern.permute.xlu0 0
      %178 = vperm.xlu0 %177, %v104
      %v179 = vpop.permute.xlu0 %178
      %182 = vset.pattern.permute.xlu0 0
      %183 = vperm.xlu0 %182, %v105
      %v184 = vpop.permute.xlu0 %183
      %v186 = vlaneseq
      %v187 = vshrl.u32 %v186, 7
      %v188 = vsub.s32 0, %v187
      %v189 = vrot.slane %v73, %v188
      %v190 = vmul.f32 %v109, %v189
      %v191 = vmul.f32 %v114, %v189
      %v192 = vmul.f32 %v119, %v189
      %v193 = vmul.f32 %v124, %v189
      %v194 = vmul.f32 %v129, %v189
      %v195 = vmul.f32 %v134, %v189
      %v196 = vmul.f32 %v139, %v189
      %v197 = vmul.f32 %v144, %v189
      %v198 = vmul.f32 %v149, %v189
      %v199 = vmul.f32 %v154, %v189
      %v200 = vmul.f32 %v159, %v189
      %v201 = vmul.f32 %v164, %v189
      %v202 = vmul.f32 %v169, %v189
      %v203 = vmul.f32 %v174, %v189
      %v204 = vmul.f32 %v179, %v189
      %v205 = vmul.f32 %v184, %v189
      %206 = vmatprep.subr.mxu0 0.0
      %207 = vmatpush1.msra.mxu0 %v56
      %208 = vmatprep.subr.mxu0 0.0
      %209 = vmatpush1.msra.mxu0 %v57
      %210 = vmatprep.subr.mxu0 0.0
      %211 = vmatpush1.msra.mxu0 %v58
      %212 = vmatprep.subr.mxu0 0.0
      %213 = vmatpush1.msra.mxu0 %v59
      %214 = vmatprep.subr.mxu0 0.0
      %215 = vmatpush1.msra.mxu0 %v60
      %216 = vmatprep.subr.mxu0 0.0
      %217 = vmatpush1.msra.mxu0 %v61
      %218 = vmatprep.subr.mxu0 0.0
      %219 = vmatpush1.msra.mxu0 %v62
      %220 = vmatprep.subr.mxu0 0.0
      %221 = vmatpush1.msra.mxu0 %v63
      %222 = vmatprep.subr.mxu0 0.0
      %223 = vmatpush1.msra.mxu0 %v64
      %224 = vmatprep.subr.mxu0 0.0
      %225 = vmatpush1.msra.mxu0 %v65
      %226 = vmatprep.subr.mxu0 0.0
      %227 = vmatpush1.msra.mxu0 %v66
      %228 = vmatprep.subr.mxu0 0.0
      %229 = vmatpush1.msra.mxu0 %v67
      %230 = vmatprep.subr.mxu0 0.0
      %231 = vmatpush1.msra.mxu0 %v68
      %232 = vmatprep.subr.mxu0 0.0
      %233 = vmatpush1.msra.mxu0 %v69
      %234 = vmatprep.subr.mxu0 0.0
      %235 = vmatpush1.msra.mxu0 %v70
      %236 = vmatprep.subr.mxu0 0.0
      %237 = vmatpush1.msra.mxu0 %v71
      %238 = vmatprep.subr.mxu0 0.0
      %239 = vmatpush1.msra.mxu0 0.0
      %240 = vmatprep.subr.mxu0 0.0
      %241 = vmatpush1.msra.mxu0 0.0
      %242 = vmatprep.subr.mxu0 0.0
      %243 = vmatpush1.msra.mxu0 0.0
      %244 = vmatprep.subr.mxu0 0.0
      %245 = vmatpush1.msra.mxu0 0.0
      %246 = vmatprep.subr.mxu0 0.0
      %247 = vmatpush1.msra.mxu0 0.0
      %248 = vmatprep.subr.mxu0 0.0
      %249 = vmatpush1.msra.mxu0 0.0
      %250 = vmatprep.subr.mxu0 0.0
      %251 = vmatpush1.msra.mxu0 0.0
      %252 = vmatprep.subr.mxu0 0.0
      %253 = vmatpush1.msra.mxu0 0.0
      %254 = vmatprep.subr.mxu0 0.0
      %255 = vmatpush1.msra.mxu0 0.0
      %256 = vmatprep.subr.mxu0 0.0
      %257 = vmatpush1.msra.mxu0 0.0
      %258 = vmatprep.subr.mxu0 0.0
      %259 = vmatpush1.msra.mxu0 0.0
      %260 = vmatprep.subr.mxu0 0.0
      %261 = vmatpush1.msra.mxu0 0.0
      %262 = vmatprep.subr.mxu0 0.0
      %263 = vmatpush1.msra.mxu0 0.0
      %264 = vmatprep.subr.mxu0 0.0
      %265 = vmatpush1.msra.mxu0 0.0
      %266 = vmatprep.subr.mxu0 0.0
      %267 = vmatpush1.msra.mxu0 0.0
      %268 = vmatprep.subr.mxu0 0.0
      %269 = vmatpush1.msra.mxu0 0.0
      %270 = vmatprep.mubr.f32.mxu0 0.0
      %271 = vmatmul.mubr.f32.gmra.mrb[0].mxu0 %v74
      %v272 = vpop.f32.mrb[0].mxu0
      %v273 = vadd.f32 %v190, %v272
      %v274 = vpop.f32.mrb[0].mxu0
      %275 = vmatprep.mubr.f32.mxu0 0.0
      %276 = vmatmul.mubr.f32.gmra.mrb[0].mxu0 %v75
      %v277 = vpop.f32.mrb[0].mxu0
      %v278 = vadd.f32 %v191, %v277
      %v279 = vpop.f32.mrb[0].mxu0
      %280 = vmatprep.mubr.f32.mxu0 0.0
      %281 = vmatmul.mubr.f32.gmra.mrb[0].mxu0 %v76
      %v282 = vpop.f32.mrb[0].mxu0
      %v283 = vadd.f32 %v192, %v282
      %v284 = vpop.f32.mrb[0].mxu0
      %285 = vmatprep.mubr.f32.mxu0 0.0
      %286 = vmatmul.mubr.f32.gmra.mrb[0].mxu0 %v77
      %v287 = vpop.f32.mrb[0].mxu0
      %v288 = vadd.f32 %v193, %v287
      %v289 = vpop.f32.mrb[0].mxu0
      %290 = vmatprep.mubr.f32.mxu0 0.0
      %291 = vmatmul.mubr.f32.gmra.mrb[0].mxu0 %v78
      %v292 = vpop.f32.mrb[0].mxu0
      %v293 = vadd.f32 %v194, %v292
      %v294 = vpop.f32.mrb[0].mxu0
      %295 = vmatprep.mubr.f32.mxu0 0.0
      %296 = vmatmul.mubr.f32.gmra.mrb[0].mxu0 %v79
      %v297 = vpop.f32.mrb[0].mxu0
      %v298 = vadd.f32 %v195, %v297
      %v299 = vpop.f32.mrb[0].mxu0
      %300 = vmatprep.mubr.f32.mxu0 0.0
      %301 = vmatmul.mubr.f32.gmra.mrb[0].mxu0 %v80
      %v302 = vpop.f32.mrb[0].mxu0
      %v303 = vadd.f32 %v196, %v302
      %v304 = vpop.f32.mrb[0].mxu0
      %305 = vmatprep.mubr.f32.mxu0 0.0
      %306 = vmatmul.mubr.f32.gmra.mrb[0].mxu0 %v81
      %v307 = vpop.f32.mrb[0].mxu0
      %v308 = vadd.f32 %v197, %v307
      %v309 = vpop.f32.mrb[0].mxu0
      %310 = vmatprep.mubr.f32.mxu0 0.0
      %311 = vmatmul.mubr.f32.gmra.mrb[0].mxu0 %v82
      %v312 = vpop.f32.mrb[0].mxu0
      %v313 = vadd.f32 %v198, %v312
      %v314 = vpop.f32.mrb[0].mxu0
      %315 = vmatprep.mubr.f32.mxu0 0.0
      %316 = vmatmul.mubr.f32.gmra.mrb[0].mxu0 %v83
      %v317 = vpop.f32.mrb[0].mxu0
      %v318 = vadd.f32 %v199, %v317
      %v319 = vpop.f32.mrb[0].mxu0
      %320 = vmatprep.mubr.f32.mxu0 0.0
      %321 = vmatmul.mubr.f32.gmra.mrb[0].mxu0 %v84
      %v322 = vpop.f32.mrb[0].mxu0
      %v323 = vadd.f32 %v200, %v322
      %v324 = vpop.f32.mrb[0].mxu0
      %325 = vmatprep.mubr.f32.mxu0 0.0
      %326 = vmatmul.mubr.f32.gmra.mrb[0].mxu0 %v85
      %v327 = vpop.f32.mrb[0].mxu0
      %v328 = vadd.f32 %v201, %v327
      %v329 = vpop.f32.mrb[0].mxu0
      %330 = vmatprep.mubr.f32.mxu0 0.0
      %331 = vmatmul.mubr.f32.gmra.mrb[0].mxu0 %v86
      %v332 = vpop.f32.mrb[0].mxu0
      %v333 = vadd.f32 %v202, %v332
      %v334 = vpop.f32.mrb[0].mxu0
      %335 = vmatprep.mubr.f32.mxu0 0.0
      %336 = vmatmul.mubr.f32.gmra.mrb[0].mxu0 %v87
      %v337 = vpop.f32.mrb[0].mxu0
      %v338 = vadd.f32 %v203, %v337
      %v339 = vpop.f32.mrb[0].mxu0
      %340 = vmatprep.mubr.f32.mxu0 0.0
      %341 = vmatmul.mubr.f32.gmra.mrb[0].mxu0 %v88
      %v342 = vpop.f32.mrb[0].mxu0
      %v343 = vadd.f32 %v204, %v342
      %v344 = vpop.f32.mrb[0].mxu0
      %345 = vmatprep.mubr.f32.mxu0 0.0
      %346 = vmatmul.mubr.f32.gmra.mrb[0].mxu0 %v89
      %v347 = vpop.f32.mrb[0].mxu0
      %v348 = vadd.f32 %v205, %v347
      %v349 = vpop.f32.mrb[0].mxu0
      %350 = vdwg.mxu0
      %v351 = vld [vmem:[%s4] sm:$0xff]
      %v352 = vld [vmem:[%s4 + $0x8] sm:$0xff]
      %v353 = vld [vmem:[%s4 + $0x10] sm:$0xff]
      %v354 = vld [vmem:[%s4 + $0x18] sm:$0xff]
      %v355 = vld [vmem:[%s4 + $0x20] sm:$0xff]
      %v356 = vld [vmem:[%s4 + $0x28] sm:$0xff]
      %v357 = vld [vmem:[%s4 + $0x30] sm:$0xff]
      %v358 = vld [vmem:[%s4 + $0x38] sm:$0xff]
      %v359 = vld [vmem:[%s4 + $0x40] sm:$0xff]
      %v360 = vld [vmem:[%s4 + $0x48] sm:$0xff]
      %v361 = vld [vmem:[%s4 + $0x50] sm:$0xff]
      %v362 = vld [vmem:[%s4 + $0x58] sm:$0xff]
      %v363 = vld [vmem:[%s4 + $0x60] sm:$0xff]
      %v364 = vld [vmem:[%s4 + $0x68] sm:$0xff]
      %v365 = vld [vmem:[%s4 + $0x70] sm:$0xff]
      %v366 = vld [vmem:[%s4 + $0x78] sm:$0xff]
      %368 = vset.pattern.permute.xlu0 0
      %369 = vperm.xlu0 %368, %v351
      %v370 = vpop.permute.xlu0 %369
      %373 = vset.pattern.permute.xlu0 0
      %374 = vperm.xlu0 %373, %v352
      %v375 = vpop.permute.xlu0 %374
      %378 = vset.pattern.permute.xlu0 0
      %379 = vperm.xlu0 %378, %v353
      %v380 = vpop.permute.xlu0 %379
      %383 = vset.pattern.permute.xlu0 0
      %384 = vperm.xlu0 %383, %v354
      %v385 = vpop.permute.xlu0 %384
      %388 = vset.pattern.permute.xlu0 0
      %389 = vperm.xlu0 %388, %v355
      %v390 = vpop.permute.xlu0 %389
      %393 = vset.pattern.permute.xlu0 0
      %394 = vperm.xlu0 %393, %v356
      %v395 = vpop.permute.xlu0 %394
      %398 = vset.pattern.permute.xlu0 0
      %399 = vperm.xlu0 %398, %v357
      %v400 = vpop.permute.xlu0 %399
      %403 = vset.pattern.permute.xlu0 0
      %404 = vperm.xlu0 %403, %v358
      %v405 = vpop.permute.xlu0 %404
      %408 = vset.pattern.permute.xlu0 0
      %409 = vperm.xlu0 %408, %v359
      %v410 = vpop.permute.xlu0 %409
      %413 = vset.pattern.permute.xlu0 0
      %414 = vperm.xlu0 %413, %v360
      %v415 = vpop.permute.xlu0 %414
      %418 = vset.pattern.permute.xlu0 0
      %419 = vperm.xlu0 %418, %v361
      %v420 = vpop.permute.xlu0 %419
      %423 = vset.pattern.permute.xlu0 0
      %424 = vperm.xlu0 %423, %v362
      %v425 = vpop.permute.xlu0 %424
      %428 = vset.pattern.permute.xlu0 0
      %429 = vperm.xlu0 %428, %v363
      %v430 = vpop.permute.xlu0 %429
      %433 = vset.pattern.permute.xlu0 0
      %434 = vperm.xlu0 %433, %v364
      %v435 = vpop.permute.xlu0 %434
      %438 = vset.pattern.permute.xlu0 0
      %439 = vperm.xlu0 %438, %v365
      %v440 = vpop.permute.xlu0 %439
      %443 = vset.pattern.permute.xlu0 0
      %444 = vperm.xlu0 %443, %v366
      %v445 = vpop.permute.xlu0 %444
      %v447 = vadd.f32 %v273, %v370
      %v448 = vadd.f32 %v278, %v375
      %v449 = vadd.f32 %v283, %v380
      %v450 = vadd.f32 %v288, %v385
      %v451 = vadd.f32 %v293, %v390
      %v452 = vadd.f32 %v298, %v395
      %v453 = vadd.f32 %v303, %v400
      %v454 = vadd.f32 %v308, %v405
      %v455 = vadd.f32 %v313, %v410
      %v456 = vadd.f32 %v318, %v415
      %v457 = vadd.f32 %v323, %v420
      %v458 = vadd.f32 %v328, %v425
      %v459 = vadd.f32 %v333, %v430
      %v460 = vadd.f32 %v338, %v435
      %v461 = vadd.f32 %v343, %v440
      %v462 = vadd.f32 %v348, %v445
      %v463 = vxor.u32 %v447, 2147483648
      %v464 = vxor.u32 %v448, 2147483648
      %v465 = vxor.u32 %v449, 2147483648
      %v466 = vxor.u32 %v450, 2147483648
      %v467 = vxor.u32 %v451, 2147483648
      %v468 = vxor.u32 %v452, 2147483648
      %v469 = vxor.u32 %v453, 2147483648
      %v470 = vxor.u32 %v454, 2147483648
      %v471 = vxor.u32 %v455, 2147483648
      %v472 = vxor.u32 %v456, 2147483648
      %v473 = vxor.u32 %v457, 2147483648
      %v474 = vxor.u32 %v458, 2147483648
      %v475 = vxor.u32 %v459, 2147483648
      %v476 = vxor.u32 %v460, 2147483648
      %v477 = vxor.u32 %v461, 2147483648
      %v478 = vxor.u32 %v462, 2147483648
      %v479 = vmul.f32 %v463, 1.442695
      %v480 = vpow.pop %v479
      %v481 = vmul.f32 %v464, 1.442695
      %v482 = vpow.pop %v481
      %v483 = vmul.f32 %v465, 1.442695
      %v484 = vpow.pop %v483
      %v485 = vmul.f32 %v466, 1.442695
      %v486 = vpow.pop %v485
      %v487 = vmul.f32 %v467, 1.442695
      %v488 = vpow.pop %v487
      %v489 = vmul.f32 %v468, 1.442695
      %v490 = vpow.pop %v489
      %v491 = vmul.f32 %v469, 1.442695
      %v492 = vpow.pop %v491
      %v493 = vmul.f32 %v470, 1.442695
      %v494 = vpow.pop %v493
      %v495 = vmul.f32 %v471, 1.442695
      %v496 = vpow.pop %v495
      %v497 = vmul.f32 %v472, 1.442695
      %v498 = vpow.pop %v497
      %v499 = vmul.f32 %v473, 1.442695
      %v500 = vpow.pop %v499
      %v501 = vmul.f32 %v474, 1.442695
      %v502 = vpow.pop %v501
      %v503 = vmul.f32 %v475, 1.442695
      %v504 = vpow.pop %v503
      %v505 = vmul.f32 %v476, 1.442695
      %v506 = vpow.pop %v505
      %v507 = vmul.f32 %v477, 1.442695
      %v508 = vpow.pop %v507
      %v509 = vmul.f32 %v478, 1.442695
      %v510 = vpow.pop %v509
      %v511 = vadd.f32 %v480, 1.0
      %v512 = vadd.f32 %v482, 1.0
      %v513 = vadd.f32 %v484, 1.0
      %v514 = vadd.f32 %v486, 1.0
      %v515 = vadd.f32 %v488, 1.0
      %v516 = vadd.f32 %v490, 1.0
      %v517 = vadd.f32 %v492, 1.0
      %v518 = vadd.f32 %v494, 1.0
      %v519 = vadd.f32 %v496, 1.0
      %v520 = vadd.f32 %v498, 1.0
      %v521 = vadd.f32 %v500, 1.0
      %v522 = vadd.f32 %v502, 1.0
      %v523 = vadd.f32 %v504, 1.0
      %v524 = vadd.f32 %v506, 1.0
      %v525 = vadd.f32 %v508, 1.0
      %v526 = vadd.f32 %v510, 1.0
      %v527 = vrcp.pop %v511
      %v528 = vmul.f32 1.0, %v527
      %v529 = vrcp.pop %v512
      %v530 = vmul.f32 1.0, %v529
      %v531 = vrcp.pop %v513
      %v532 = vmul.f32 1.0, %v531
      %v533 = vrcp.pop %v514
      %v534 = vmul.f32 1.0, %v533
      %v535 = vrcp.pop %v515
      %v536 = vmul.f32 1.0, %v535
      %v537 = vrcp.pop %v516
      %v538 = vmul.f32 1.0, %v537
      %v539 = vrcp.pop %v517
      %v540 = vmul.f32 1.0, %v539
      %v541 = vrcp.pop %v518
      %v542 = vmul.f32 1.0, %v541
      %v543 = vrcp.pop %v519
      %v544 = vmul.f32 1.0, %v543
      %v545 = vrcp.pop %v520
      %v546 = vmul.f32 1.0, %v545
      %v547 = vrcp.pop %v521
      %v548 = vmul.f32 1.0, %v547
      %v549 = vrcp.pop %v522
      %v550 = vmul.f32 1.0, %v549
      %v551 = vrcp.pop %v523
      %v552 = vmul.f32 1.0, %v551
      %v553 = vrcp.pop %v524
      %v554 = vmul.f32 1.0, %v553
      %v555 = vrcp.pop %v525
      %v556 = vmul.f32 1.0, %v555
      %v557 = vrcp.pop %v526
      %v558 = vmul.f32 1.0, %v557
      %v559 = vld [vmem:[%s2 + $0x80] sm:$0xff]
      %v560 = vld [vmem:[%s2 + $0x88] sm:$0xff]
      %v561 = vld [vmem:[%s2 + $0x90] sm:$0xff]
      %v562 = vld [vmem:[%s2 + $0x98] sm:$0xff]
      %v563 = vld [vmem:[%s2 + $0xa0] sm:$0xff]
      %v564 = vld [vmem:[%s2 + $0xa8] sm:$0xff]
      %v565 = vld [vmem:[%s2 + $0xb0] sm:$0xff]
      %v566 = vld [vmem:[%s2 + $0xb8] sm:$0xff]
      %v567 = vld [vmem:[%s2 + $0xc0] sm:$0xff]
      %v568 = vld [vmem:[%s2 + $0xc8] sm:$0xff]
      %v569 = vld [vmem:[%s2 + $0xd0] sm:$0xff]
      %v570 = vld [vmem:[%s2 + $0xd8] sm:$0xff]
      %v571 = vld [vmem:[%s2 + $0xe0] sm:$0xff]
      %v572 = vld [vmem:[%s2 + $0xe8] sm:$0xff]
      %v573 = vld [vmem:[%s2 + $0xf0] sm:$0xff]
      %v574 = vld [vmem:[%s2 + $0xf8] sm:$0xff]
      %v575 = vld [vmem:[%s3 + $0x80] sm:$0xff]
      %v576 = vld [vmem:[%s3 + $0x88] sm:$0xff]
      %v577 = vld [vmem:[%s3 + $0x90] sm:$0xff]
      %v578 = vld [vmem:[%s3 + $0x98] sm:$0xff]
      %v579 = vld [vmem:[%s3 + $0xa0] sm:$0xff]
      %v580 = vld [vmem:[%s3 + $0xa8] sm:$0xff]
      %v581 = vld [vmem:[%s3 + $0xb0] sm:$0xff]
      %v582 = vld [vmem:[%s3 + $0xb8] sm:$0xff]
      %v583 = vld [vmem:[%s3 + $0xc0] sm:$0xff]
      %v584 = vld [vmem:[%s3 + $0xc8] sm:$0xff]
      %v585 = vld [vmem:[%s3 + $0xd0] sm:$0xff]
      %v586 = vld [vmem:[%s3 + $0xd8] sm:$0xff]
      %v587 = vld [vmem:[%s3 + $0xe0] sm:$0xff]
      %v588 = vld [vmem:[%s3 + $0xe8] sm:$0xff]
      %v589 = vld [vmem:[%s3 + $0xf0] sm:$0xff]
      %v590 = vld [vmem:[%s3 + $0xf8] sm:$0xff]
      %592 = vset.pattern.permute.xlu0 0
      %593 = vperm.xlu0 %592, %v575
      %v594 = vpop.permute.xlu0 %593
      %597 = vset.pattern.permute.xlu0 0
      %598 = vperm.xlu0 %597, %v576
      %v599 = vpop.permute.xlu0 %598
      %602 = vset.pattern.permute.xlu0 0
      %603 = vperm.xlu0 %602, %v577
      %v604 = vpop.permute.xlu0 %603
      %607 = vset.pattern.permute.xlu0 0
      %608 = vperm.xlu0 %607, %v578
      %v609 = vpop.permute.xlu0 %608
      %612 = vset.pattern.permute.xlu0 0
      %613 = vperm.xlu0 %612, %v579
      %v614 = vpop.permute.xlu0 %613
      %617 = vset.pattern.permute.xlu0 0
      %618 = vperm.xlu0 %617, %v580
      %v619 = vpop.permute.xlu0 %618
      %622 = vset.pattern.permute.xlu0 0
      %623 = vperm.xlu0 %622, %v581
      %v624 = vpop.permute.xlu0 %623
      %627 = vset.pattern.permute.xlu0 0
      %628 = vperm.xlu0 %627, %v582
      %v629 = vpop.permute.xlu0 %628
      %632 = vset.pattern.permute.xlu0 0
      %633 = vperm.xlu0 %632, %v583
      %v634 = vpop.permute.xlu0 %633
      %637 = vset.pattern.permute.xlu0 0
      %638 = vperm.xlu0 %637, %v584
      %v639 = vpop.permute.xlu0 %638
      %642 = vset.pattern.permute.xlu0 0
      %643 = vperm.xlu0 %642, %v585
      %v644 = vpop.permute.xlu0 %643
      %647 = vset.pattern.permute.xlu0 0
      %648 = vperm.xlu0 %647, %v586
      %v649 = vpop.permute.xlu0 %648
      %652 = vset.pattern.permute.xlu0 0
      %653 = vperm.xlu0 %652, %v587
      %v654 = vpop.permute.xlu0 %653
      %657 = vset.pattern.permute.xlu0 0
      %658 = vperm.xlu0 %657, %v588
      %v659 = vpop.permute.xlu0 %658
      %662 = vset.pattern.permute.xlu0 0
      %663 = vperm.xlu0 %662, %v589
      %v664 = vpop.permute.xlu0 %663
      %667 = vset.pattern.permute.xlu0 0
      %668 = vperm.xlu0 %667, %v590
      %v669 = vpop.permute.xlu0 %668
      %v671 = vmul.f32 %v594, %v189
      %v672 = vmul.f32 %v599, %v189
      %v673 = vmul.f32 %v604, %v189
      %v674 = vmul.f32 %v609, %v189
      %v675 = vmul.f32 %v614, %v189
      %v676 = vmul.f32 %v619, %v189
      %v677 = vmul.f32 %v624, %v189
      %v678 = vmul.f32 %v629, %v189
      %v679 = vmul.f32 %v634, %v189
      %v680 = vmul.f32 %v639, %v189
      %v681 = vmul.f32 %v644, %v189
      %v682 = vmul.f32 %v649, %v189
      %v683 = vmul.f32 %v654, %v189
      %v684 = vmul.f32 %v659, %v189
      %v685 = vmul.f32 %v664, %v189
      %v686 = vmul.f32 %v669, %v189
      %687 = vmatprep.subr.mxu0 0.0
      %688 = vmatpush1.msra.mxu0 %v56
      %689 = vmatprep.subr.mxu0 0.0
      %690 = vmatpush1.msra.mxu0 %v57
      %691 = vmatprep.subr.mxu0 0.0
      %692 = vmatpush1.msra.mxu0 %v58
      %693 = vmatprep.subr.mxu0 0.0
      %694 = vmatpush1.msra.mxu0 %v59
      %695 = vmatprep.subr.mxu0 0.0
      %696 = vmatpush1.msra.mxu0 %v60
      %697 = vmatprep.subr.mxu0 0.0
      %698 = vmatpush1.msra.mxu0 %v61
      %699 = vmatprep.subr.mxu0 0.0
      %700 = vmatpush1.msra.mxu0 %v62
      %701 = vmatprep.subr.mxu0 0.0
      %702 = vmatpush1.msra.mxu0 %v63
      %703 = vmatprep.subr.mxu0 0.0
      %704 = vmatpush1.msra.mxu0 %v64
      %705 = vmatprep.subr.mxu0 0.0
      %706 = vmatpush1.msra.mxu0 %v65
      %707 = vmatprep.subr.mxu0 0.0
      %708 = vmatpush1.msra.mxu0 %v66
      %709 = vmatprep.subr.mxu0 0.0
      %710 = vmatpush1.msra.mxu0 %v67
      %711 = vmatprep.subr.mxu0 0.0
      %712 = vmatpush1.msra.mxu0 %v68
      %713 = vmatprep.subr.mxu0 0.0
      %714 = vmatpush1.msra.mxu0 %v69
      %715 = vmatprep.subr.mxu0 0.0
      %716 = vmatpush1.msra.mxu0 %v70
      %717 = vmatprep.subr.mxu0 0.0
      %718 = vmatpush1.msra.mxu0 %v71
      %719 = vmatprep.subr.mxu0 0.0
      %720 = vmatpush1.msra.mxu0 0.0
      %721 = vmatprep.subr.mxu0 0.0
      %722 = vmatpush1.msra.mxu0 0.0
      %723 = vmatprep.subr.mxu0 0.0
      %724 = vmatpush1.msra.mxu0 0.0
      %725 = vmatprep.subr.mxu0 0.0
      %726 = vmatpush1.msra.mxu0 0.0
      %727 = vmatprep.subr.mxu0 0.0
      %728 = vmatpush1.msra.mxu0 0.0
      %729 = vmatprep.subr.mxu0 0.0
      %730 = vmatpush1.msra.mxu0 0.0
      %731 = vmatprep.subr.mxu0 0.0
      %732 = vmatpush1.msra.mxu0 0.0
      %733 = vmatprep.subr.mxu0 0.0
      %734 = vmatpush1.msra.mxu0 0.0
      %735 = vmatprep.subr.mxu0 0.0
      %736 = vmatpush1.msra.mxu0 0.0
      %737 = vmatprep.subr.mxu0 0.0
      %738 = vmatpush1.msra.mxu0 0.0
      %739 = vmatprep.subr.mxu0 0.0
      %740 = vmatpush1.msra.mxu0 0.0
      %741 = vmatprep.subr.mxu0 0.0
      %742 = vmatpush1.msra.mxu0 0.0
      %743 = vmatprep.subr.mxu0 0.0
      %744 = vmatpush1.msra.mxu0 0.0
      %745 = vmatprep.subr.mxu0 0.0
      %746 = vmatpush1.msra.mxu0 0.0
      %747 = vmatprep.subr.mxu0 0.0
      %748 = vmatpush1.msra.mxu0 0.0
      %749 = vmatprep.subr.mxu0 0.0
      %750 = vmatpush1.msra.mxu0 0.0
      %751 = vmatprep.mubr.f32.mxu0 0.0
      %752 = vmatmul.mubr.f32.gmra.mrb[0].mxu0 %v559
      %v753 = vpop.f32.mrb[0].mxu0
      %v754 = vadd.f32 %v671, %v753
      %v755 = vpop.f32.mrb[0].mxu0
      %756 = vmatprep.mubr.f32.mxu0 0.0
      %757 = vmatmul.mubr.f32.gmra.mrb[0].mxu0 %v560
      %v758 = vpop.f32.mrb[0].mxu0
      %v759 = vadd.f32 %v672, %v758
      %v760 = vpop.f32.mrb[0].mxu0
      %761 = vmatprep.mubr.f32.mxu0 0.0
      %762 = vmatmul.mubr.f32.gmra.mrb[0].mxu0 %v561
      %v763 = vpop.f32.mrb[0].mxu0
      %v764 = vadd.f32 %v673, %v763
      %v765 = vpop.f32.mrb[0].mxu0
      %766 = vmatprep.mubr.f32.mxu0 0.0
      %767 = vmatmul.mubr.f32.gmra.mrb[0].mxu0 %v562
      %v768 = vpop.f32.mrb[0].mxu0
      %v769 = vadd.f32 %v674, %v768
      %v770 = vpop.f32.mrb[0].mxu0
      %771 = vmatprep.mubr.f32.mxu0 0.0
      %772 = vmatmul.mubr.f32.gmra.mrb[0].mxu0 %v563
      %v773 = vpop.f32.mrb[0].mxu0
      %v774 = vadd.f32 %v675, %v773
      %v775 = vpop.f32.mrb[0].mxu0
      %776 = vmatprep.mubr.f32.mxu0 0.0
      %777 = vmatmul.mubr.f32.gmra.mrb[0].mxu0 %v564
      %v778 = vpop.f32.mrb[0].mxu0
      %v779 = vadd.f32 %v676, %v778
      %v780 = vpop.f32.mrb[0].mxu0
      %781 = vmatprep.mubr.f32.mxu0 0.0
      %782 = vmatmul.mubr.f32.gmra.mrb[0].mxu0 %v565
      %v783 = vpop.f32.mrb[0].mxu0
      %v784 = vadd.f32 %v677, %v783
      %v785 = vpop.f32.mrb[0].mxu0
      %786 = vmatprep.mubr.f32.mxu0 0.0
      %787 = vmatmul.mubr.f32.gmra.mrb[0].mxu0 %v566
      %v788 = vpop.f32.mrb[0].mxu0
      %v789 = vadd.f32 %v678, %v788
      %v790 = vpop.f32.mrb[0].mxu0
      %791 = vmatprep.mubr.f32.mxu0 0.0
      %792 = vmatmul.mubr.f32.gmra.mrb[0].mxu0 %v567
      %v793 = vpop.f32.mrb[0].mxu0
      %v794 = vadd.f32 %v679, %v793
      %v795 = vpop.f32.mrb[0].mxu0
      %796 = vmatprep.mubr.f32.mxu0 0.0
      %797 = vmatmul.mubr.f32.gmra.mrb[0].mxu0 %v568
      %v798 = vpop.f32.mrb[0].mxu0
      %v799 = vadd.f32 %v680, %v798
      %v800 = vpop.f32.mrb[0].mxu0
      %801 = vmatprep.mubr.f32.mxu0 0.0
      %802 = vmatmul.mubr.f32.gmra.mrb[0].mxu0 %v569
      %v803 = vpop.f32.mrb[0].mxu0
      %v804 = vadd.f32 %v681, %v803
      %v805 = vpop.f32.mrb[0].mxu0
      %806 = vmatprep.mubr.f32.mxu0 0.0
      %807 = vmatmul.mubr.f32.gmra.mrb[0].mxu0 %v570
      %v808 = vpop.f32.mrb[0].mxu0
      %v809 = vadd.f32 %v682, %v808
      %v810 = vpop.f32.mrb[0].mxu0
      %811 = vmatprep.mubr.f32.mxu0 0.0
      %812 = vmatmul.mubr.f32.gmra.mrb[0].mxu0 %v571
      %v813 = vpop.f32.mrb[0].mxu0
      %v814 = vadd.f32 %v683, %v813
      %v815 = vpop.f32.mrb[0].mxu0
      %816 = vmatprep.mubr.f32.mxu0 0.0
      %817 = vmatmul.mubr.f32.gmra.mrb[0].mxu0 %v572
      %v818 = vpop.f32.mrb[0].mxu0
      %v819 = vadd.f32 %v684, %v818
      %v820 = vpop.f32.mrb[0].mxu0
      %821 = vmatprep.mubr.f32.mxu0 0.0
      %822 = vmatmul.mubr.f32.gmra.mrb[0].mxu0 %v573
      %v823 = vpop.f32.mrb[0].mxu0
      %v824 = vadd.f32 %v685, %v823
      %v825 = vpop.f32.mrb[0].mxu0
      %826 = vmatprep.mubr.f32.mxu0 0.0
      %827 = vmatmul.mubr.f32.gmra.mrb[0].mxu0 %v574
      %v828 = vpop.f32.mrb[0].mxu0
      %v829 = vadd.f32 %v686, %v828
      %v830 = vpop.f32.mrb[0].mxu0
      %831 = vdwg.mxu0
      %v832 = vld [vmem:[%s4 + $0x80] sm:$0xff]
      %v833 = vld [vmem:[%s4 + $0x88] sm:$0xff]
      %v834 = vld [vmem:[%s4 + $0x90] sm:$0xff]
      %v835 = vld [vmem:[%s4 + $0x98] sm:$0xff]
      %v836 = vld [vmem:[%s4 + $0xa0] sm:$0xff]
      %v837 = vld [vmem:[%s4 + $0xa8] sm:$0xff]
      %v838 = vld [vmem:[%s4 + $0xb0] sm:$0xff]
      %v839 = vld [vmem:[%s4 + $0xb8] sm:$0xff]
      %v840 = vld [vmem:[%s4 + $0xc0] sm:$0xff]
      %v841 = vld [vmem:[%s4 + $0xc8] sm:$0xff]
      %v842 = vld [vmem:[%s4 + $0xd0] sm:$0xff]
      %v843 = vld [vmem:[%s4 + $0xd8] sm:$0xff]
      %v844 = vld [vmem:[%s4 + $0xe0] sm:$0xff]
      %v845 = vld [vmem:[%s4 + $0xe8] sm:$0xff]
      %v846 = vld [vmem:[%s4 + $0xf0] sm:$0xff]
      %v847 = vld [vmem:[%s4 + $0xf8] sm:$0xff]
      %849 = vset.pattern.permute.xlu0 0
      %850 = vperm.xlu0 %849, %v832
      %v851 = vpop.permute.xlu0 %850
      %854 = vset.pattern.permute.xlu0 0
      %855 = vperm.xlu0 %854, %v833
      %v856 = vpop.permute.xlu0 %855
      %859 = vset.pattern.permute.xlu0 0
      %860 = vperm.xlu0 %859, %v834
      %v861 = vpop.permute.xlu0 %860
      %864 = vset.pattern.permute.xlu0 0
      %865 = vperm.xlu0 %864, %v835
      %v866 = vpop.permute.xlu0 %865
      %869 = vset.pattern.permute.xlu0 0
      %870 = vperm.xlu0 %869, %v836
      %v871 = vpop.permute.xlu0 %870
      %874 = vset.pattern.permute.xlu0 0
      %875 = vperm.xlu0 %874, %v837
      %v876 = vpop.permute.xlu0 %875
      %879 = vset.pattern.permute.xlu0 0
      %880 = vperm.xlu0 %879, %v838
      %v881 = vpop.permute.xlu0 %880
      %884 = vset.pattern.permute.xlu0 0
      %885 = vperm.xlu0 %884, %v839
      %v886 = vpop.permute.xlu0 %885
      %889 = vset.pattern.permute.xlu0 0
      %890 = vperm.xlu0 %889, %v840
      %v891 = vpop.permute.xlu0 %890
      %894 = vset.pattern.permute.xlu0 0
      %895 = vperm.xlu0 %894, %v841
      %v896 = vpop.permute.xlu0 %895
      %899 = vset.pattern.permute.xlu0 0
      %900 = vperm.xlu0 %899, %v842
      %v901 = vpop.permute.xlu0 %900
      %904 = vset.pattern.permute.xlu0 0
      %905 = vperm.xlu0 %904, %v843
      %v906 = vpop.permute.xlu0 %905
      %909 = vset.pattern.permute.xlu0 0
      %910 = vperm.xlu0 %909, %v844
      %v911 = vpop.permute.xlu0 %910
      %914 = vset.pattern.permute.xlu0 0
      %915 = vperm.xlu0 %914, %v845
      %v916 = vpop.permute.xlu0 %915
      %919 = vset.pattern.permute.xlu0 0
      %920 = vperm.xlu0 %919, %v846
      %v921 = vpop.permute.xlu0 %920
      %924 = vset.pattern.permute.xlu0 0
      %925 = vperm.xlu0 %924, %v847
      %v926 = vpop.permute.xlu0 %925
      %v928 = vadd.f32 %v754, %v851
      %v929 = vadd.f32 %v759, %v856
      %v930 = vadd.f32 %v764, %v861
      %v931 = vadd.f32 %v769, %v866
      %v932 = vadd.f32 %v774, %v871
      %v933 = vadd.f32 %v779, %v876
      %v934 = vadd.f32 %v784, %v881
      %v935 = vadd.f32 %v789, %v886
      %v936 = vadd.f32 %v794, %v891
      %v937 = vadd.f32 %v799, %v896
      %v938 = vadd.f32 %v804, %v901
      %v939 = vadd.f32 %v809, %v906
      %v940 = vadd.f32 %v814, %v911
      %v941 = vadd.f32 %v819, %v916
      %v942 = vadd.f32 %v824, %v921
      %v943 = vadd.f32 %v829, %v926
      %v944 = vxor.u32 %v928, 2147483648
      %v945 = vxor.u32 %v929, 2147483648
      %v946 = vxor.u32 %v930, 2147483648
      %v947 = vxor.u32 %v931, 2147483648
      %v948 = vxor.u32 %v932, 2147483648
      %v949 = vxor.u32 %v933, 2147483648
      %v950 = vxor.u32 %v934, 2147483648
      %v951 = vxor.u32 %v935, 2147483648
      %v952 = vxor.u32 %v936, 2147483648
      %v953 = vxor.u32 %v937, 2147483648
      %v954 = vxor.u32 %v938, 2147483648
      %v955 = vxor.u32 %v939, 2147483648
      %v956 = vxor.u32 %v940, 2147483648
      %v957 = vxor.u32 %v941, 2147483648
      %v958 = vxor.u32 %v942, 2147483648
      %v959 = vxor.u32 %v943, 2147483648
      %v960 = vmul.f32 %v944, 1.442695
      %v961 = vpow.pop %v960
      %v962 = vmul.f32 %v945, 1.442695
      %v963 = vpow.pop %v962
      %v964 = vmul.f32 %v946, 1.442695
      %v965 = vpow.pop %v964
      %v966 = vmul.f32 %v947, 1.442695
      %v967 = vpow.pop %v966
      %v968 = vmul.f32 %v948, 1.442695
      %v969 = vpow.pop %v968
      %v970 = vmul.f32 %v949, 1.442695
      %v971 = vpow.pop %v970
      %v972 = vmul.f32 %v950, 1.442695
      %v973 = vpow.pop %v972
      %v974 = vmul.f32 %v951, 1.442695
      %v975 = vpow.pop %v974
      %v976 = vmul.f32 %v952, 1.442695
      %v977 = vpow.pop %v976
      %v978 = vmul.f32 %v953, 1.442695
      %v979 = vpow.pop %v978
      %v980 = vmul.f32 %v954, 1.442695
      %v981 = vpow.pop %v980
      %v982 = vmul.f32 %v955, 1.442695
      %v983 = vpow.pop %v982
      %v984 = vmul.f32 %v956, 1.442695
      %v985 = vpow.pop %v984
      %v986 = vmul.f32 %v957, 1.442695
      %v987 = vpow.pop %v986
      %v988 = vmul.f32 %v958, 1.442695
      %v989 = vpow.pop %v988
      %v990 = vmul.f32 %v959, 1.442695
      %v991 = vpow.pop %v990
      %v992 = vadd.f32 %v961, 1.0
      %v993 = vadd.f32 %v963, 1.0
      %v994 = vadd.f32 %v965, 1.0
      %v995 = vadd.f32 %v967, 1.0
      %v996 = vadd.f32 %v969, 1.0
      %v997 = vadd.f32 %v971, 1.0
      %v998 = vadd.f32 %v973, 1.0
      %v999 = vadd.f32 %v975, 1.0
      %v1000 = vadd.f32 %v977, 1.0
      %v1001 = vadd.f32 %v979, 1.0
      %v1002 = vadd.f32 %v981, 1.0
      %v1003 = vadd.f32 %v983, 1.0
      %v1004 = vadd.f32 %v985, 1.0
      %v1005 = vadd.f32 %v987, 1.0
      %v1006 = vadd.f32 %v989, 1.0
      %v1007 = vadd.f32 %v991, 1.0
      %v1008 = vrcp.pop %v992
      %v1009 = vmul.f32 1.0, %v1008
      %v1010 = vrcp.pop %v993
      %v1011 = vmul.f32 1.0, %v1010
      %v1012 = vrcp.pop %v994
      %v1013 = vmul.f32 1.0, %v1012
      %v1014 = vrcp.pop %v995
      %v1015 = vmul.f32 1.0, %v1014
      %v1016 = vrcp.pop %v996
      %v1017 = vmul.f32 1.0, %v1016
      %v1018 = vrcp.pop %v997
      %v1019 = vmul.f32 1.0, %v1018
      %v1020 = vrcp.pop %v998
      %v1021 = vmul.f32 1.0, %v1020
      %v1022 = vrcp.pop %v999
      %v1023 = vmul.f32 1.0, %v1022
      %v1024 = vrcp.pop %v1000
      %v1025 = vmul.f32 1.0, %v1024
      %v1026 = vrcp.pop %v1001
      %v1027 = vmul.f32 1.0, %v1026
      %v1028 = vrcp.pop %v1002
      %v1029 = vmul.f32 1.0, %v1028
      %v1030 = vrcp.pop %v1003
      %v1031 = vmul.f32 1.0, %v1030
      %v1032 = vrcp.pop %v1004
      %v1033 = vmul.f32 1.0, %v1032
      %v1034 = vrcp.pop %v1005
      %v1035 = vmul.f32 1.0, %v1034
      %v1036 = vrcp.pop %v1006
      %v1037 = vmul.f32 1.0, %v1036
      %v1038 = vrcp.pop %v1007
      %v1039 = vmul.f32 1.0, %v1038
      %v1040 = vld [vmem:[%s2 + $0x100] sm:$0xff]
      %v1041 = vld [vmem:[%s2 + $0x108] sm:$0xff]
      %v1042 = vld [vmem:[%s2 + $0x110] sm:$0xff]
      %v1043 = vld [vmem:[%s2 + $0x118] sm:$0xff]
      %v1044 = vld [vmem:[%s2 + $0x120] sm:$0xff]
      %v1045 = vld [vmem:[%s2 + $0x128] sm:$0xff]
      %v1046 = vld [vmem:[%s2 + $0x130] sm:$0xff]
      %v1047 = vld [vmem:[%s2 + $0x138] sm:$0xff]
      %v1048 = vld [vmem:[%s2 + $0x140] sm:$0xff]
      %v1049 = vld [vmem:[%s2 + $0x148] sm:$0xff]
      %v1050 = vld [vmem:[%s2 + $0x150] sm:$0xff]
      %v1051 = vld [vmem:[%s2 + $0x158] sm:$0xff]
      %v1052 = vld [vmem:[%s2 + $0x160] sm:$0xff]
      %v1053 = vld [vmem:[%s2 + $0x168] sm:$0xff]
      %v1054 = vld [vmem:[%s2 + $0x170] sm:$0xff]
      %v1055 = vld [vmem:[%s2 + $0x178] sm:$0xff]
      %v1056 = vld [vmem:[%s5] sm:$0xff]
      %v1057 = vld [vmem:[%s5 + $0x8] sm:$0xff]
      %v1058 = vld [vmem:[%s5 + $0x10] sm:$0xff]
      %v1059 = vld [vmem:[%s5 + $0x18] sm:$0xff]
      %v1060 = vld [vmem:[%s5 + $0x20] sm:$0xff]
      %v1061 = vld [vmem:[%s5 + $0x28] sm:$0xff]
      %v1062 = vld [vmem:[%s5 + $0x30] sm:$0xff]
      %v1063 = vld [vmem:[%s5 + $0x38] sm:$0xff]
      %v1064 = vld [vmem:[%s5 + $0x40] sm:$0xff]
      %v1065 = vld [vmem:[%s5 + $0x48] sm:$0xff]
      %v1066 = vld [vmem:[%s5 + $0x50] sm:$0xff]
      %v1067 = vld [vmem:[%s5 + $0x58] sm:$0xff]
      %v1068 = vld [vmem:[%s5 + $0x60] sm:$0xff]
      %v1069 = vld [vmem:[%s5 + $0x68] sm:$0xff]
      %v1070 = vld [vmem:[%s5 + $0x70] sm:$0xff]
      %v1071 = vld [vmem:[%s5 + $0x78] sm:$0xff]
      %1073 = vset.pattern.permute.xlu0 0
      %1074 = vperm.xlu0 %1073, %v1056
      %v1075 = vpop.permute.xlu0 %1074
      %1078 = vset.pattern.permute.xlu0 0
      %1079 = vperm.xlu0 %1078, %v1057
      %v1080 = vpop.permute.xlu0 %1079
      %1083 = vset.pattern.permute.xlu0 0
      %1084 = vperm.xlu0 %1083, %v1058
      %v1085 = vpop.permute.xlu0 %1084
      %1088 = vset.pattern.permute.xlu0 0
      %1089 = vperm.xlu0 %1088, %v1059
      %v1090 = vpop.permute.xlu0 %1089
      %1093 = vset.pattern.permute.xlu0 0
      %1094 = vperm.xlu0 %1093, %v1060
      %v1095 = vpop.permute.xlu0 %1094
      %1098 = vset.pattern.permute.xlu0 0
      %1099 = vperm.xlu0 %1098, %v1061
      %v1100 = vpop.permute.xlu0 %1099
      %1103 = vset.pattern.permute.xlu0 0
      %1104 = vperm.xlu0 %1103, %v1062
      %v1105 = vpop.permute.xlu0 %1104
      %1108 = vset.pattern.permute.xlu0 0
      %1109 = vperm.xlu0 %1108, %v1063
      %v1110 = vpop.permute.xlu0 %1109
      %1113 = vset.pattern.permute.xlu0 0
      %1114 = vperm.xlu0 %1113, %v1064
      %v1115 = vpop.permute.xlu0 %1114
      %1118 = vset.pattern.permute.xlu0 0
      %1119 = vperm.xlu0 %1118, %v1065
      %v1120 = vpop.permute.xlu0 %1119
      %1123 = vset.pattern.permute.xlu0 0
      %1124 = vperm.xlu0 %1123, %v1066
      %v1125 = vpop.permute.xlu0 %1124
      %1128 = vset.pattern.permute.xlu0 0
      %1129 = vperm.xlu0 %1128, %v1067
      %v1130 = vpop.permute.xlu0 %1129
      %1133 = vset.pattern.permute.xlu0 0
      %1134 = vperm.xlu0 %1133, %v1068
      %v1135 = vpop.permute.xlu0 %1134
      %1138 = vset.pattern.permute.xlu0 0
      %1139 = vperm.xlu0 %1138, %v1069
      %v1140 = vpop.permute.xlu0 %1139
      %1143 = vset.pattern.permute.xlu0 0
      %1144 = vperm.xlu0 %1143, %v1070
      %v1145 = vpop.permute.xlu0 %1144
      %1148 = vset.pattern.permute.xlu0 0
      %1149 = vperm.xlu0 %1148, %v1071
      %v1150 = vpop.permute.xlu0 %1149
      %1152 = vmatprep.subr.mxu0 0.0
      %1153 = vmatpush1.msra.mxu0 %v56
      %1154 = vmatprep.subr.mxu0 0.0
      %1155 = vmatpush1.msra.mxu0 %v57
      %1156 = vmatprep.subr.mxu0 0.0
      %1157 = vmatpush1.msra.mxu0 %v58
      %1158 = vmatprep.subr.mxu0 0.0
      %1159 = vmatpush1.msra.mxu0 %v59
      %1160 = vmatprep.subr.mxu0 0.0
      %1161 = vmatpush1.msra.mxu0 %v60
      %1162 = vmatprep.subr.mxu0 0.0
      %1163 = vmatpush1.msra.mxu0 %v61
      %1164 = vmatprep.subr.mxu0 0.0
      %1165 = vmatpush1.msra.mxu0 %v62
      %1166 = vmatprep.subr.mxu0 0.0
      %1167 = vmatpush1.msra.mxu0 %v63
      %1168 = vmatprep.subr.mxu0 0.0
      %1169 = vmatpush1.msra.mxu0 %v64
      %1170 = vmatprep.subr.mxu0 0.0
      %1171 = vmatpush1.msra.mxu0 %v65
      %1172 = vmatprep.subr.mxu0 0.0
      %1173 = vmatpush1.msra.mxu0 %v66
      %1174 = vmatprep.subr.mxu0 0.0
      %1175 = vmatpush1.msra.mxu0 %v67
      %1176 = vmatprep.subr.mxu0 0.0
      %1177 = vmatpush1.msra.mxu0 %v68
      %1178 = vmatprep.subr.mxu0 0.0
      %1179 = vmatpush1.msra.mxu0 %v69
      %1180 = vmatprep.subr.mxu0 0.0
      %1181 = vmatpush1.msra.mxu0 %v70
      %1182 = vmatprep.subr.mxu0 0.0
      %1183 = vmatpush1.msra.mxu0 %v71
      %1184 = vmatprep.subr.mxu0 0.0
      %1185 = vmatpush1.msra.mxu0 0.0
      %1186 = vmatprep.subr.mxu0 0.0
      %1187 = vmatpush1.msra.mxu0 0.0
      %1188 = vmatprep.subr.mxu0 0.0
      %1189 = vmatpush1.msra.mxu0 0.0
      %1190 = vmatprep.subr.mxu0 0.0
      %1191 = vmatpush1.msra.mxu0 0.0
      %1192 = vmatprep.subr.mxu0 0.0
      %1193 = vmatpush1.msra.mxu0 0.0
      %1194 = vmatprep.subr.mxu0 0.0
      %1195 = vmatpush1.msra.mxu0 0.0
      %1196 = vmatprep.subr.mxu0 0.0
      %1197 = vmatpush1.msra.mxu0 0.0
      %1198 = vmatprep.subr.mxu0 0.0
      %1199 = vmatpush1.msra.mxu0 0.0
      %1200 = vmatprep.subr.mxu0 0.0
      %1201 = vmatpush1.msra.mxu0 0.0
      %1202 = vmatprep.subr.mxu0 0.0
      %1203 = vmatpush1.msra.mxu0 0.0
      %1204 = vmatprep.subr.mxu0 0.0
      %1205 = vmatpush1.msra.mxu0 0.0
      %1206 = vmatprep.subr.mxu0 0.0
      %1207 = vmatpush1.msra.mxu0 0.0
      %1208 = vmatprep.subr.mxu0 0.0
      %1209 = vmatpush1.msra.mxu0 0.0
      %1210 = vmatprep.subr.mxu0 0.0
      %1211 = vmatpush1.msra.mxu0 0.0
      %1212 = vmatprep.subr.mxu0 0.0
      %1213 = vmatpush1.msra.mxu0 0.0
      %1214 = vmatprep.subr.mxu0 0.0
      %1215 = vmatpush1.msra.mxu0 0.0
      %1216 = vmatprep.mubr.f32.mxu0 0.0
      %1217 = vmatmul.mubr.f32.gmra.mrb[0].mxu0 %v1040
      %v1218 = vpop.f32.mrb[0].mxu0
      %v1219 = vadd.f32 %v1075, %v1218
      %v1220 = vpop.f32.mrb[0].mxu0
      %1221 = vmatprep.mubr.f32.mxu0 0.0
      %1222 = vmatmul.mubr.f32.gmra.mrb[0].mxu0 %v1041
      %v1223 = vpop.f32.mrb[0].mxu0
      %v1224 = vadd.f32 %v1080, %v1223
      %v1225 = vpop.f32.mrb[0].mxu0
      %1226 = vmatprep.mubr.f32.mxu0 0.0
      %1227 = vmatmul.mubr.f32.gmra.mrb[0].mxu0 %v1042
      %v1228 = vpop.f32.mrb[0].mxu0
      %v1229 = vadd.f32 %v1085, %v1228
      %v1230 = vpop.f32.mrb[0].mxu0
      %1231 = vmatprep.mubr.f32.mxu0 0.0
      %1232 = vmatmul.mubr.f32.gmra.mrb[0].mxu0 %v1043
      %v1233 = vpop.f32.mrb[0].mxu0
      %v1234 = vadd.f32 %v1090, %v1233
      %v1235 = vpop.f32.mrb[0].mxu0
      %1236 = vmatprep.mubr.f32.mxu0 0.0
      %1237 = vmatmul.mubr.f32.gmra.mrb[0].mxu0 %v1044
      %v1238 = vpop.f32.mrb[0].mxu0
      %v1239 = vadd.f32 %v1095, %v1238
      %v1240 = vpop.f32.mrb[0].mxu0
      %1241 = vmatprep.mubr.f32.mxu0 0.0
      %1242 = vmatmul.mubr.f32.gmra.mrb[0].mxu0 %v1045
      %v1243 = vpop.f32.mrb[0].mxu0
      %v1244 = vadd.f32 %v1100, %v1243
      %v1245 = vpop.f32.mrb[0].mxu0
      %1246 = vmatprep.mubr.f32.mxu0 0.0
      %1247 = vmatmul.mubr.f32.gmra.mrb[0].mxu0 %v1046
      %v1248 = vpop.f32.mrb[0].mxu0
      %v1249 = vadd.f32 %v1105, %v1248
      %v1250 = vpop.f32.mrb[0].mxu0
      %1251 = vmatprep.mubr.f32.mxu0 0.0
      %1252 = vmatmul.mubr.f32.gmra.mrb[0].mxu0 %v1047
      %v1253 = vpop.f32.mrb[0].mxu0
      %v1254 = vadd.f32 %v1110, %v1253
      %v1255 = vpop.f32.mrb[0].mxu0
      %1256 = vmatprep.mubr.f32.mxu0 0.0
      %1257 = vmatmul.mubr.f32.gmra.mrb[0].mxu0 %v1048
      %v1258 = vpop.f32.mrb[0].mxu0
      %v1259 = vadd.f32 %v1115, %v1258
      %v1260 = vpop.f32.mrb[0].mxu0
      %1261 = vmatprep.mubr.f32.mxu0 0.0
      %1262 = vmatmul.mubr.f32.gmra.mrb[0].mxu0 %v1049
      %v1263 = vpop.f32.mrb[0].mxu0
      %v1264 = vadd.f32 %v1120, %v1263
      %v1265 = vpop.f32.mrb[0].mxu0
      %1266 = vmatprep.mubr.f32.mxu0 0.0
      %1267 = vmatmul.mubr.f32.gmra.mrb[0].mxu0 %v1050
      %v1268 = vpop.f32.mrb[0].mxu0
      %v1269 = vadd.f32 %v1125, %v1268
      %v1270 = vpop.f32.mrb[0].mxu0
      %1271 = vmatprep.mubr.f32.mxu0 0.0
      %1272 = vmatmul.mubr.f32.gmra.mrb[0].mxu0 %v1051
      %v1273 = vpop.f32.mrb[0].mxu0
      %v1274 = vadd.f32 %v1130, %v1273
      %v1275 = vpop.f32.mrb[0].mxu0
      %1276 = vmatprep.mubr.f32.mxu0 0.0
      %1277 = vmatmul.mubr.f32.gmra.mrb[0].mxu0 %v1052
      %v1278 = vpop.f32.mrb[0].mxu0
      %v1279 = vadd.f32 %v1135, %v1278
      %v1280 = vpop.f32.mrb[0].mxu0
      %1281 = vmatprep.mubr.f32.mxu0 0.0
      %1282 = vmatmul.mubr.f32.gmra.mrb[0].mxu0 %v1053
      %v1283 = vpop.f32.mrb[0].mxu0
      %v1284 = vadd.f32 %v1140, %v1283
      %v1285 = vpop.f32.mrb[0].mxu0
      %1286 = vmatprep.mubr.f32.mxu0 0.0
      %1287 = vmatmul.mubr.f32.gmra.mrb[0].mxu0 %v1054
      %v1288 = vpop.f32.mrb[0].mxu0
      %v1289 = vadd.f32 %v1145, %v1288
      %v1290 = vpop.f32.mrb[0].mxu0
      %1291 = vmatprep.mubr.f32.mxu0 0.0
      %1292 = vmatmul.mubr.f32.gmra.mrb[0].mxu0 %v1055
      %v1293 = vpop.f32.mrb[0].mxu0
      %v1294 = vadd.f32 %v1150, %v1293
      %v1295 = vpop.f32.mrb[0].mxu0
      %1296 = vdwg.mxu0
      %v1297 = vmul.f32 %v528, %v1219
      %v1298 = vmul.f32 %v530, %v1224
      %v1299 = vmul.f32 %v532, %v1229
      %v1300 = vmul.f32 %v534, %v1234
      %v1301 = vmul.f32 %v536, %v1239
      %v1302 = vmul.f32 %v538, %v1244
      %v1303 = vmul.f32 %v540, %v1249
      %v1304 = vmul.f32 %v542, %v1254
      %v1305 = vmul.f32 %v544, %v1259
      %v1306 = vmul.f32 %v546, %v1264
      %v1307 = vmul.f32 %v548, %v1269
      %v1308 = vmul.f32 %v550, %v1274
      %v1309 = vmul.f32 %v552, %v1279
      %v1310 = vmul.f32 %v554, %v1284
      %v1311 = vmul.f32 %v556, %v1289
      %v1312 = vmul.f32 %v558, %v1294
      %v1313 = vld [vmem:[%s3 + $0x100] sm:$0xff]
      %v1314 = vld [vmem:[%s3 + $0x108] sm:$0xff]
      %v1315 = vld [vmem:[%s3 + $0x110] sm:$0xff]
      %v1316 = vld [vmem:[%s3 + $0x118] sm:$0xff]
      %v1317 = vld [vmem:[%s3 + $0x120] sm:$0xff]
      %v1318 = vld [vmem:[%s3 + $0x128] sm:$0xff]
      %v1319 = vld [vmem:[%s3 + $0x130] sm:$0xff]
      %v1320 = vld [vmem:[%s3 + $0x138] sm:$0xff]
      %v1321 = vld [vmem:[%s3 + $0x140] sm:$0xff]
      %v1322 = vld [vmem:[%s3 + $0x148] sm:$0xff]
      %v1323 = vld [vmem:[%s3 + $0x150] sm:$0xff]
      %v1324 = vld [vmem:[%s3 + $0x158] sm:$0xff]
      %v1325 = vld [vmem:[%s3 + $0x160] sm:$0xff]
      %v1326 = vld [vmem:[%s3 + $0x168] sm:$0xff]
      %v1327 = vld [vmem:[%s3 + $0x170] sm:$0xff]
      %v1328 = vld [vmem:[%s3 + $0x178] sm:$0xff]
      %1330 = vset.pattern.permute.xlu0 0
      %1331 = vperm.xlu0 %1330, %v1313
      %v1332 = vpop.permute.xlu0 %1331
      %1335 = vset.pattern.permute.xlu0 0
      %1336 = vperm.xlu0 %1335, %v1314
      %v1337 = vpop.permute.xlu0 %1336
      %1340 = vset.pattern.permute.xlu0 0
      %1341 = vperm.xlu0 %1340, %v1315
      %v1342 = vpop.permute.xlu0 %1341
      %1345 = vset.pattern.permute.xlu0 0
      %1346 = vperm.xlu0 %1345, %v1316
      %v1347 = vpop.permute.xlu0 %1346
      %1350 = vset.pattern.permute.xlu0 0
      %1351 = vperm.xlu0 %1350, %v1317
      %v1352 = vpop.permute.xlu0 %1351
      %1355 = vset.pattern.permute.xlu0 0
      %1356 = vperm.xlu0 %1355, %v1318
      %v1357 = vpop.permute.xlu0 %1356
      %1360 = vset.pattern.permute.xlu0 0
      %1361 = vperm.xlu0 %1360, %v1319
      %v1362 = vpop.permute.xlu0 %1361
      %1365 = vset.pattern.permute.xlu0 0
      %1366 = vperm.xlu0 %1365, %v1320
      %v1367 = vpop.permute.xlu0 %1366
      %1370 = vset.pattern.permute.xlu0 0
      %1371 = vperm.xlu0 %1370, %v1321
      %v1372 = vpop.permute.xlu0 %1371
      %1375 = vset.pattern.permute.xlu0 0
      %1376 = vperm.xlu0 %1375, %v1322
      %v1377 = vpop.permute.xlu0 %1376
      %1380 = vset.pattern.permute.xlu0 0
      %1381 = vperm.xlu0 %1380, %v1323
      %v1382 = vpop.permute.xlu0 %1381
      %1385 = vset.pattern.permute.xlu0 0
      %1386 = vperm.xlu0 %1385, %v1324
      %v1387 = vpop.permute.xlu0 %1386
      %1390 = vset.pattern.permute.xlu0 0
      %1391 = vperm.xlu0 %1390, %v1325
      %v1392 = vpop.permute.xlu0 %1391
      %1395 = vset.pattern.permute.xlu0 0
      %1396 = vperm.xlu0 %1395, %v1326
      %v1397 = vpop.permute.xlu0 %1396
      %1400 = vset.pattern.permute.xlu0 0
      %1401 = vperm.xlu0 %1400, %v1327
      %v1402 = vpop.permute.xlu0 %1401
      %1405 = vset.pattern.permute.xlu0 0
      %1406 = vperm.xlu0 %1405, %v1328
      %v1407 = vpop.permute.xlu0 %1406
      %v1409 = vmul.f32 %v1332, %v189
      %v1410 = vmul.f32 %v1337, %v189
      %v1411 = vmul.f32 %v1342, %v189
      %v1412 = vmul.f32 %v1347, %v189
      %v1413 = vmul.f32 %v1352, %v189
      %v1414 = vmul.f32 %v1357, %v189
      %v1415 = vmul.f32 %v1362, %v189
      %v1416 = vmul.f32 %v1367, %v189
      %v1417 = vmul.f32 %v1372, %v189
      %v1418 = vmul.f32 %v1377, %v189
      %v1419 = vmul.f32 %v1382, %v189
      %v1420 = vmul.f32 %v1387, %v189
      %v1421 = vmul.f32 %v1392, %v189
      %v1422 = vmul.f32 %v1397, %v189
      %v1423 = vmul.f32 %v1402, %v189
      %v1424 = vmul.f32 %v1407, %v189
      %v1425 = vadd.f32 %v1297, %v1409
      %v1426 = vadd.f32 %v1298, %v1410
      %v1427 = vadd.f32 %v1299, %v1411
      %v1428 = vadd.f32 %v1300, %v1412
      %v1429 = vadd.f32 %v1301, %v1413
      %v1430 = vadd.f32 %v1302, %v1414
      %v1431 = vadd.f32 %v1303, %v1415
      %v1432 = vadd.f32 %v1304, %v1416
      %v1433 = vadd.f32 %v1305, %v1417
      %v1434 = vadd.f32 %v1306, %v1418
      %v1435 = vadd.f32 %v1307, %v1419
      %v1436 = vadd.f32 %v1308, %v1420
      %v1437 = vadd.f32 %v1309, %v1421
      %v1438 = vadd.f32 %v1310, %v1422
      %v1439 = vadd.f32 %v1311, %v1423
      %v1440 = vadd.f32 %v1312, %v1424
      %v1441 = vld [vmem:[%s4 + $0x100] sm:$0xff]
      %v1442 = vld [vmem:[%s4 + $0x108] sm:$0xff]
      %v1443 = vld [vmem:[%s4 + $0x110] sm:$0xff]
      %v1444 = vld [vmem:[%s4 + $0x118] sm:$0xff]
      %v1445 = vld [vmem:[%s4 + $0x120] sm:$0xff]
      %v1446 = vld [vmem:[%s4 + $0x128] sm:$0xff]
      %v1447 = vld [vmem:[%s4 + $0x130] sm:$0xff]
      %v1448 = vld [vmem:[%s4 + $0x138] sm:$0xff]
      %v1449 = vld [vmem:[%s4 + $0x140] sm:$0xff]
      %v1450 = vld [vmem:[%s4 + $0x148] sm:$0xff]
      %v1451 = vld [vmem:[%s4 + $0x150] sm:$0xff]
      %v1452 = vld [vmem:[%s4 + $0x158] sm:$0xff]
      %v1453 = vld [vmem:[%s4 + $0x160] sm:$0xff]
      %v1454 = vld [vmem:[%s4 + $0x168] sm:$0xff]
      %v1455 = vld [vmem:[%s4 + $0x170] sm:$0xff]
      %v1456 = vld [vmem:[%s4 + $0x178] sm:$0xff]
      %1458 = vset.pattern.permute.xlu0 0
      %1459 = vperm.xlu0 %1458, %v1441
      %v1460 = vpop.permute.xlu0 %1459
      %1463 = vset.pattern.permute.xlu0 0
      %1464 = vperm.xlu0 %1463, %v1442
      %v1465 = vpop.permute.xlu0 %1464
      %1468 = vset.pattern.permute.xlu0 0
      %1469 = vperm.xlu0 %1468, %v1443
      %v1470 = vpop.permute.xlu0 %1469
      %1473 = vset.pattern.permute.xlu0 0
      %1474 = vperm.xlu0 %1473, %v1444
      %v1475 = vpop.permute.xlu0 %1474
      %1478 = vset.pattern.permute.xlu0 0
      %1479 = vperm.xlu0 %1478, %v1445
      %v1480 = vpop.permute.xlu0 %1479
      %1483 = vset.pattern.permute.xlu0 0
      %1484 = vperm.xlu0 %1483, %v1446
      %v1485 = vpop.permute.xlu0 %1484
      %1488 = vset.pattern.permute.xlu0 0
      %1489 = vperm.xlu0 %1488, %v1447
      %v1490 = vpop.permute.xlu0 %1489
      %1493 = vset.pattern.permute.xlu0 0
      %1494 = vperm.xlu0 %1493, %v1448
      %v1495 = vpop.permute.xlu0 %1494
      %1498 = vset.pattern.permute.xlu0 0
      %1499 = vperm.xlu0 %1498, %v1449
      %v1500 = vpop.permute.xlu0 %1499
      %1503 = vset.pattern.permute.xlu0 0
      %1504 = vperm.xlu0 %1503, %v1450
      %v1505 = vpop.permute.xlu0 %1504
      %1508 = vset.pattern.permute.xlu0 0
      %1509 = vperm.xlu0 %1508, %v1451
      %v1510 = vpop.permute.xlu0 %1509
      %1513 = vset.pattern.permute.xlu0 0
      %1514 = vperm.xlu0 %1513, %v1452
      %v1515 = vpop.permute.xlu0 %1514
      %1518 = vset.pattern.permute.xlu0 0
      %1519 = vperm.xlu0 %1518, %v1453
      %v1520 = vpop.permute.xlu0 %1519
      %1523 = vset.pattern.permute.xlu0 0
      %1524 = vperm.xlu0 %1523, %v1454
      %v1525 = vpop.permute.xlu0 %1524
      %1528 = vset.pattern.permute.xlu0 0
      %1529 = vperm.xlu0 %1528, %v1455
      %v1530 = vpop.permute.xlu0 %1529
      %1533 = vset.pattern.permute.xlu0 0
      %1534 = vperm.xlu0 %1533, %v1456
      %v1535 = vpop.permute.xlu0 %1534
      %v1537 = vadd.f32 %v1425, %v1460
      %v1538 = vadd.f32 %v1426, %v1465
      %v1539 = vadd.f32 %v1427, %v1470
      %v1540 = vadd.f32 %v1428, %v1475
      %v1541 = vadd.f32 %v1429, %v1480
      %v1542 = vadd.f32 %v1430, %v1485
      %v1543 = vadd.f32 %v1431, %v1490
      %v1544 = vadd.f32 %v1432, %v1495
      %v1545 = vadd.f32 %v1433, %v1500
      %v1546 = vadd.f32 %v1434, %v1505
      %v1547 = vadd.f32 %v1435, %v1510
      %v1548 = vadd.f32 %v1436, %v1515
      %v1549 = vadd.f32 %v1437, %v1520
      %v1550 = vadd.f32 %v1438, %v1525
      %v1551 = vadd.f32 %v1439, %v1530
      %v1552 = vadd.f32 %v1440, %v1535
      %v1553 = vtanh.pop %v1537
      %v1554 = vtanh.pop %v1538
      %v1555 = vtanh.pop %v1539
      %v1556 = vtanh.pop %v1540
      %v1557 = vtanh.pop %v1541
      %v1558 = vtanh.pop %v1542
      %v1559 = vtanh.pop %v1543
      %v1560 = vtanh.pop %v1544
      %v1561 = vtanh.pop %v1545
      %v1562 = vtanh.pop %v1546
      %v1563 = vtanh.pop %v1547
      %v1564 = vtanh.pop %v1548
      %v1565 = vtanh.pop %v1549
      %v1566 = vtanh.pop %v1550
      %v1567 = vtanh.pop %v1551
      %v1568 = vtanh.pop %v1552
      %v1569 = vsub.f32 1.0, %v1009
      %v1570 = vsub.f32 1.0, %v1011
      %v1571 = vsub.f32 1.0, %v1013
      %v1572 = vsub.f32 1.0, %v1015
      %v1573 = vsub.f32 1.0, %v1017
      %v1574 = vsub.f32 1.0, %v1019
      %v1575 = vsub.f32 1.0, %v1021
      %v1576 = vsub.f32 1.0, %v1023
      %v1577 = vsub.f32 1.0, %v1025
      %v1578 = vsub.f32 1.0, %v1027
      %v1579 = vsub.f32 1.0, %v1029
      %v1580 = vsub.f32 1.0, %v1031
      %v1581 = vsub.f32 1.0, %v1033
      %v1582 = vsub.f32 1.0, %v1035
      %v1583 = vsub.f32 1.0, %v1037
      %v1584 = vsub.f32 1.0, %v1039
      %v1585 = vmul.f32 %v1569, %v1553
      %v1586 = vmul.f32 %v1570, %v1554
      %v1587 = vmul.f32 %v1571, %v1555
      %v1588 = vmul.f32 %v1572, %v1556
      %v1589 = vmul.f32 %v1573, %v1557
      %v1590 = vmul.f32 %v1574, %v1558
      %v1591 = vmul.f32 %v1575, %v1559
      %v1592 = vmul.f32 %v1576, %v1560
      %v1593 = vmul.f32 %v1577, %v1561
      %v1594 = vmul.f32 %v1578, %v1562
      %v1595 = vmul.f32 %v1579, %v1563
      %v1596 = vmul.f32 %v1580, %v1564
      %v1597 = vmul.f32 %v1581, %v1565
      %v1598 = vmul.f32 %v1582, %v1566
      %v1599 = vmul.f32 %v1583, %v1567
      %v1600 = vmul.f32 %v1584, %v1568
      %v1601 = vmul.f32 %v1009, %v56
      %v1602 = vmul.f32 %v1011, %v57
      %v1603 = vmul.f32 %v1013, %v58
      %v1604 = vmul.f32 %v1015, %v59
      %v1605 = vmul.f32 %v1017, %v60
      %v1606 = vmul.f32 %v1019, %v61
      %v1607 = vmul.f32 %v1021, %v62
      %v1608 = vmul.f32 %v1023, %v63
      %v1609 = vmul.f32 %v1025, %v64
      %v1610 = vmul.f32 %v1027, %v65
      %v1611 = vmul.f32 %v1029, %v66
      %v1612 = vmul.f32 %v1031, %v67
      %v1613 = vmul.f32 %v1033, %v68
      %v1614 = vmul.f32 %v1035, %v69
      %v1615 = vmul.f32 %v1037, %v70
      %v1616 = vmul.f32 %v1039, %v71
      %v1617 = vadd.f32 %v1585, %v1601
      %v1618 = vadd.f32 %v1586, %v1602
      %v1619 = vadd.f32 %v1587, %v1603
      %v1620 = vadd.f32 %v1588, %v1604
      %v1621 = vadd.f32 %v1589, %v1605
      %v1622 = vadd.f32 %v1590, %v1606
      %v1623 = vadd.f32 %v1591, %v1607
      %v1624 = vadd.f32 %v1592, %v1608
      %v1625 = vadd.f32 %v1593, %v1609
      %v1626 = vadd.f32 %v1594, %v1610
      %v1627 = vadd.f32 %v1595, %v1611
      %v1628 = vadd.f32 %v1596, %v1612
      %v1629 = vadd.f32 %v1597, %v1613
      %v1630 = vadd.f32 %v1598, %v1614
      %v1631 = vadd.f32 %v1599, %v1615
      %v1632 = vadd.f32 %v1600, %v1616
      %v1633 = vld [vmem:[%s6] sm:$0xff]
      %v1634 = vld [vmem:[%s6 + $0x8] sm:$0xff]
      %v1635 = vld [vmem:[%s6 + $0x10] sm:$0xff]
      %v1636 = vld [vmem:[%s6 + $0x18] sm:$0xff]
      %v1637 = vld [vmem:[%s6 + $0x20] sm:$0xff]
      %v1638 = vld [vmem:[%s6 + $0x28] sm:$0xff]
      %v1639 = vld [vmem:[%s6 + $0x30] sm:$0xff]
      %v1640 = vld [vmem:[%s6 + $0x38] sm:$0xff]
      %v1641 = vld [vmem:[%s6 + $0x40] sm:$0xff]
      %v1642 = vld [vmem:[%s6 + $0x48] sm:$0xff]
      %v1643 = vld [vmem:[%s6 + $0x50] sm:$0xff]
      %v1644 = vld [vmem:[%s6 + $0x58] sm:$0xff]
      %v1645 = vld [vmem:[%s6 + $0x60] sm:$0xff]
      %v1646 = vld [vmem:[%s6 + $0x68] sm:$0xff]
      %v1647 = vld [vmem:[%s6 + $0x70] sm:$0xff]
      %v1648 = vld [vmem:[%s6 + $0x78] sm:$0xff]
      %1650 = vset.pattern.permute.xlu0 0
      %1651 = vperm.xlu0 %1650, %v1633
      %v1652 = vpop.permute.xlu0 %1651
      %1655 = vset.pattern.permute.xlu0 0
      %1656 = vperm.xlu0 %1655, %v1634
      %v1657 = vpop.permute.xlu0 %1656
      %1660 = vset.pattern.permute.xlu0 0
      %1661 = vperm.xlu0 %1660, %v1635
      %v1662 = vpop.permute.xlu0 %1661
      %1665 = vset.pattern.permute.xlu0 0
      %1666 = vperm.xlu0 %1665, %v1636
      %v1667 = vpop.permute.xlu0 %1666
      %1670 = vset.pattern.permute.xlu0 0
      %1671 = vperm.xlu0 %1670, %v1637
      %v1672 = vpop.permute.xlu0 %1671
      %1675 = vset.pattern.permute.xlu0 0
      %1676 = vperm.xlu0 %1675, %v1638
      %v1677 = vpop.permute.xlu0 %1676
      %1680 = vset.pattern.permute.xlu0 0
      %1681 = vperm.xlu0 %1680, %v1639
      %v1682 = vpop.permute.xlu0 %1681
      %1685 = vset.pattern.permute.xlu0 0
      %1686 = vperm.xlu0 %1685, %v1640
      %v1687 = vpop.permute.xlu0 %1686
      %1690 = vset.pattern.permute.xlu0 0
      %1691 = vperm.xlu0 %1690, %v1641
      %v1692 = vpop.permute.xlu0 %1691
      %1695 = vset.pattern.permute.xlu0 0
      %1696 = vperm.xlu0 %1695, %v1642
      %v1697 = vpop.permute.xlu0 %1696
      %1700 = vset.pattern.permute.xlu0 0
      %1701 = vperm.xlu0 %1700, %v1643
      %v1702 = vpop.permute.xlu0 %1701
      %1705 = vset.pattern.permute.xlu0 0
      %1706 = vperm.xlu0 %1705, %v1644
      %v1707 = vpop.permute.xlu0 %1706
      %1710 = vset.pattern.permute.xlu0 0
      %1711 = vperm.xlu0 %1710, %v1645
      %v1712 = vpop.permute.xlu0 %1711
      %1715 = vset.pattern.permute.xlu0 0
      %1716 = vperm.xlu0 %1715, %v1646
      %v1717 = vpop.permute.xlu0 %1716
      %1720 = vset.pattern.permute.xlu0 0
      %1721 = vperm.xlu0 %1720, %v1647
      %v1722 = vpop.permute.xlu0 %1721
      %1725 = vset.pattern.permute.xlu0 0
      %1726 = vperm.xlu0 %1725, %v1648
      %v1727 = vpop.permute.xlu0 %1726
      %v1729 = vmul.f32 %v1617, %v1652
      %v1730 = vmul.f32 %v1618, %v1657
      %v1731 = vmul.f32 %v1619, %v1662
      %v1732 = vmul.f32 %v1620, %v1667
      %v1733 = vmul.f32 %v1621, %v1672
      %v1734 = vmul.f32 %v1622, %v1677
      %v1735 = vmul.f32 %v1623, %v1682
      %v1736 = vmul.f32 %v1624, %v1687
      %v1737 = vmul.f32 %v1625, %v1692
      %v1738 = vmul.f32 %v1626, %v1697
      %v1739 = vmul.f32 %v1627, %v1702
      %v1740 = vmul.f32 %v1628, %v1707
      %v1741 = vmul.f32 %v1629, %v1712
      %v1742 = vmul.f32 %v1630, %v1717
      %v1743 = vmul.f32 %v1631, %v1722
      %v1744 = vmul.f32 %v1632, %v1727
      %vm1745 = vcmask 64512
      %v1746 = vsel %vm1745, %v1729, 0.0
      %v1747 = vsel %vm1745, %v1730, 0.0
      %v1748 = vadd.f32 %v1746, %v1747
      %v1749 = vsel %vm1745, %v1731, 0.0
      %v1750 = vadd.f32 %v1748, %v1749
      %v1751 = vsel %vm1745, %v1732, 0.0
      %v1752 = vadd.f32 %v1750, %v1751
      %v1753 = vsel %vm1745, %v1733, 0.0
      %v1754 = vadd.f32 %v1752, %v1753
      %v1755 = vsel %vm1745, %v1734, 0.0
      %v1756 = vadd.f32 %v1754, %v1755
      %v1757 = vsel %vm1745, %v1735, 0.0
      %v1758 = vadd.f32 %v1756, %v1757
      %v1759 = vsel %vm1745, %v1736, 0.0
      %v1760 = vadd.f32 %v1758, %v1759
      %v1761 = vsel %vm1745, %v1737, 0.0
      %v1762 = vadd.f32 %v1760, %v1761
      %v1763 = vsel %vm1745, %v1738, 0.0
      %v1764 = vadd.f32 %v1762, %v1763
      %v1765 = vsel %vm1745, %v1739, 0.0
      %v1766 = vadd.f32 %v1764, %v1765
      %v1767 = vsel %vm1745, %v1740, 0.0
      %v1768 = vadd.f32 %v1766, %v1767
      %v1769 = vsel %vm1745, %v1741, 0.0
      %v1770 = vadd.f32 %v1768, %v1769
      %v1771 = vsel %vm1745, %v1742, 0.0
      %v1772 = vadd.f32 %v1770, %v1771
      %v1773 = vsel %vm1745, %v1743, 0.0
      %v1774 = vadd.f32 %v1772, %v1773
      %v1775 = vsel %vm1745, %v1744, 0.0
      %v1776 = vadd.f32 %v1774, %v1775
      %v1777 = vrot.slane %v1776, 4
      %v1778 = vadd.f32 %v1776, %v1777
      %v1779 = vrot.slane %v1778, 2
      %v1780 = vadd.f32 %v1778, %v1779
      %v1781 = vrot.slane %v1780, 1
      %v1782 = vadd.f32 %v1780, %v1781
      %v1783 = vld [vmem:[#allocation2] sm:$0x1]
      %1785 = vset.pattern.permute.xlu0 0
      %1786 = vperm.xlu0 %1785, %v1783
      %v1787 = vpop.permute.xlu0 %1786
      %v1789 = vlaneseq
      %v1790 = vshrl.u32 %v1789, 7
      %v1791 = vsub.s32 0, %v1790
      %v1792 = vrot.slane %v1787, %v1791
      %v1793 = vadd.f32 %v1782, %v1792
      %v1794 = vxor.u32 %v1793, 2147483648
      %v1795 = vmul.f32 %v1794, 1.442695
      %v1796 = vpow.pop %v1795
      %v1797 = vadd.f32 %v1796, 1.0
      %v1798 = vrcp.pop %v1797
      %v1799 = vmul.f32 1.0, %v1798
      %s1800 = scalar_lea.vmem [#allocation3], %s51
      %vm1801 = vcmask 57344
      %1802 = vst.msk [vmem:[%s1800] sm:$0x1] %vm1801, %v1799
    $region38: #{tpu_custom_call.1} parent=1 // loop_footer
      %s55 = sadd.s32 1, %s51
    $region39: #{tpu_custom_call.1} parent=1 // loop_footer_branch
      %50 = sbr.rel target = $region35
    $region40: #{tpu_custom_call.1} parent=1 // loop_exit
      _
    %vm1803 = vcmask 64512
    %1804 = vst.msk [vmem:[%s9] sm:$0xff] %vm1803, %v56
    %1805 = vst.msk [vmem:[%s9 + $0x8] sm:$0xff] %vm1803, %v57
    %1806 = vst.msk [vmem:[%s9 + $0x10] sm:$0xff] %vm1803, %v58
    %1807 = vst.msk [vmem:[%s9 + $0x18] sm:$0xff] %vm1803, %v59
    %1808 = vst.msk [vmem:[%s9 + $0x20] sm:$0xff] %vm1803, %v60
    %1809 = vst.msk [vmem:[%s9 + $0x28] sm:$0xff] %vm1803, %v61
    %1810 = vst.msk [vmem:[%s9 + $0x30] sm:$0xff] %vm1803, %v62
    %1811 = vst.msk [vmem:[%s9 + $0x38] sm:$0xff] %vm1803, %v63
    %1812 = vst.msk [vmem:[%s9 + $0x40] sm:$0xff] %vm1803, %v64
    %1813 = vst.msk [vmem:[%s9 + $0x48] sm:$0xff] %vm1803, %v65
    %1814 = vst.msk [vmem:[%s9 + $0x50] sm:$0xff] %vm1803, %v66
    %1815 = vst.msk [vmem:[%s9 + $0x58] sm:$0xff] %vm1803, %v67
    %1816 = vst.msk [vmem:[%s9 + $0x60] sm:$0xff] %vm1803, %v68
    %1817 = vst.msk [vmem:[%s9 + $0x68] sm:$0xff] %vm1803, %v69
    %1818 = vst.msk [vmem:[%s9 + $0x70] sm:$0xff] %vm1803, %v70
    %1819 = vst.msk [vmem:[%s9 + $0x78] sm:$0xff] %vm1803, %v71
    // Predicated region
    $region41: #{tpu_custom_call.1} parent=1 // pred_check
      _
    $region42: #{tpu_custom_call.1} parent=1 // pred_check_branch
      %1821 = sbr.rel (0) target = $region44
    $region43: #{tpu_custom_call.1} parent=1 // pred_region
      %s1823 = ssub.s32 128, 128
      %1824 = vsyncadd [#allocation4], %s1823
      %s1826 = sshll.u32 [#allocation3], 4
      %s1827 = int_to_ptr.vmem [resolvable:$true] %s1826
      %1829 = dma.vmem_to_hbm [thread:$0]  %s1827, 128, %s8, [#allocation4]
    $region44: #{tpu_custom_call.1} parent=1 // pred_fallthru
      _
    // Predicated region
    $region45: #{tpu_custom_call.1} parent=1 // pred_check
      _
    $region46: #{tpu_custom_call.1} parent=1 // pred_check_branch
      %1831 = sbr.rel (0) target = $region48
    $region47: #{tpu_custom_call.1} parent=1 // pred_region
      _
    $region48: #{tpu_custom_call.1} parent=1 // pred_fallthru
      _
    // Predicated region
    $region49: #{tpu_custom_call.1} parent=1 // pred_check
      _
    $region50: #{tpu_custom_call.1} parent=1 // pred_check_branch
      %1833 = sbr.rel (0) target = $region52
    $region51: #{tpu_custom_call.1} parent=1 // pred_region
      %1834 = dma.done [#allocation4], 128
    $region52: #{tpu_custom_call.1} parent=1 // pred_fallthru
      _
    // Predicated region
    $region53: #{tpu_custom_call.1} parent=1 // pred_check
      _
    $region54: #{tpu_custom_call.1} parent=1 // pred_check_branch
      %1836 = sbr.rel (0) target = $region56
    $region55: #{tpu_custom_call.1} parent=1 // pred_region
      _
    $region56: #{tpu_custom_call.1} parent=1 // pred_fallthru
      _
    %1837 = vsyncpa [#allocation4], 1

</llo_original>
